<compile_context>
chip_gen: v7x
topology: tpu7x:2x2x1
jax: 0.10.0
libtpu: 0.0.40
codegen_flags: <defaults>
</compile_context>

<pallas_src>
import jax
import jax.numpy as jnp
from jax.experimental import pallas as pl
from jax.experimental.pallas import tpu as pltpu


def _round_up(n, m):
    return ((n + m - 1) // m) * m


def _choose_tb(batch):
    """Batch tile rows: multiple of 16 (bf16 sublane packing), large enough to
    amortize per-step overhead, but >=2 grid steps when possible (v7x megacore)."""
    b16 = _round_up(max(batch, 1), 16)
    if b16 <= 32:
        return b16                              # single tiny step
    # aim for exactly 2 steps up to 1024 rows, then cap the tile at 512 rows/step
    return min(512, _round_up((b16 + 1) // 2, 16))


def mlp_kernel(x_ref, w1_ref, b1_ref, w2_ref, b2_ref, w3_ref, b3_ref, o_ref):
    # Layer 1: bf16 MXU matmul, f32 accumulation; bias + ReLU in f32, back to bf16.
    h1 = jnp.dot(x_ref[...], w1_ref[...], preferred_element_type=jnp.float32)
    h1 = jnp.maximum(h1 + b1_ref[...], 0.0).astype(jnp.bfloat16)
    # Layer 2
    h2 = jnp.dot(h1, w2_ref[...], preferred_element_type=jnp.float32)
    h2 = jnp.maximum(h2 + b2_ref[...], 0.0).astype(jnp.bfloat16)
    # Layer 3 (no activation), stored as f32 in the narrow (tb, output_dim) output.
    out = jnp.dot(h2, w3_ref[...], preferred_element_type=jnp.float32) + b3_ref[...]
    o_ref[...] = out.astype(o_ref.dtype)


@jax.jit
def mlp_forward(x, params):
    """Fused MLP forward.

    x: (B, input_dim) float32/bf16.
    params: (w1, b1, w2, b2, w3, b3) with bf16 weights (in, out) and f32 biases (1, out)
            (see prepare_params).
    Returns (B, output_dim) float32.
    """
    w1, b1, w2, b2, w3, b3 = params
    B, din = x.shape
    H = w1.shape[1]
    dout = w3.shape[1]

    tb = _choose_tb(B)
    bp = _round_up(B, tb)

    # Only the batch remainder is padded (zero rows -> bias-only outputs, sliced off).
    x_b = x.astype(jnp.bfloat16)
    if bp != B:
        x_b = jnp.pad(x_b, ((0, bp - B), (0, 0)))

    grid = (bp // tb,)

    flops = 2 * bp * (din * H + H * H + H * dout)
    bytes_accessed = (
        bp * din * 2                                   # x (bf16)
        + (w1.size + w2.size + w3.size) * 2            # weights (bf16)
        + (b1.size + b2.size + b3.size) * 4            # biases (f32)
        + bp * dout * 4                                 # output (f32)
    )

    out = pl.pallas_call(
        mlp_kernel,
        out_shape=jax.ShapeDtypeStruct((bp, dout), jnp.float32),
        grid=grid,
        in_specs=[
            pl.BlockSpec((tb, din), lambda i: (i, 0)),   # x tile (unpadded feature dim)
            pl.BlockSpec((din, H), lambda i: (0, 0)),    # w1 (VMEM-resident)
            pl.BlockSpec((1, H), lambda i: (0, 0)),      # b1
            pl.BlockSpec((H, H), lambda i: (0, 0)),      # w2
            pl.BlockSpec((1, H), lambda i: (0, 0)),      # b2
            pl.BlockSpec((H, dout), lambda i: (0, 0)),   # w3 (unpadded output dim)
            pl.BlockSpec((1, dout), lambda i: (0, 0)),   # b3
        ],
        out_specs=pl.BlockSpec((tb, dout), lambda i: (i, 0)),
        compiler_params=pltpu.CompilerParams(
            dimension_semantics=("parallel",),
        ),
        cost_estimate=pl.CostEstimate(
            flops=flops, transcendentals=0, bytes_accessed=bytes_accessed
        ),
    )(x_b, w1, b1, w2, b2, w3, b3)

    return out[:B] if bp != B else out


def init_linear(key, fan_in, fan_out, dtype=jnp.float32):
    """PyTorch nn.Linear default init (uniform +/- 1/sqrt(fan_in)).

    Weight stored as (fan_in, fan_out) = transpose of PyTorch layout.
    Bias stored as (1, fan_out).
    """
    kw, kb = jax.random.split(key)
    bound = 1.0 / jnp.sqrt(jnp.float32(fan_in))
    w = jax.random.uniform(kw, (fan_in, fan_out), dtype, -bound, bound)
    b = jax.random.uniform(kb, (1, fan_out), dtype, -bound, bound)
    return w, b


def prepare_params(params):
    """Cast weights to bf16 (MXU inputs) and biases to f32; no shape padding needed."""
    w1, b1, w2, b2, w3, b3 = params
    return (
        w1.astype(jnp.bfloat16), b1.astype(jnp.float32),
        w2.astype(jnp.bfloat16), b2.astype(jnp.float32),
        w3.astype(jnp.bfloat16), b3.astype(jnp.float32),
    )


def reference_mlp(x, params):
    """Pure-JAX fp32 reference of MLPNetwork.forward."""
    w1, b1, w2, b2, w3, b3 = params
    h1 = jnp.maximum(x @ w1 + b1, 0.0)
    h2 = jnp.maximum(h1 @ w2 + b2, 0.0)
    return h2 @ w3 + b3


if __name__ == "__main__":
    # Small shapes consistent with MLPNetwork(input_dim, output_dim, hidden_size=256).
    batch = 512
    input_dim = 16
    hidden_size = 256   # module default; lane-aligned and MXU-friendly
    output_dim = 4

    key = jax.random.PRNGKey(0)
    kx, k1, k2, k3 = jax.random.split(key, 4)

    x = jax.random.normal(kx, (batch, input_dim), jnp.float32)
    w1, b1 = init_linear(k1, input_dim, hidden_size)
    w2, b2 = init_linear(k2, hidden_size, hidden_size)
    w3, b3 = init_linear(k3, hidden_size, output_dim)
    params = (w1, b1, w2, b2, w3, b3)

    kernel_params = prepare_params(params)

    out = mlp_forward(x, kernel_params)
    out = jax.block_until_ready(out)

    ref = reference_mlp(x, params)
    assert out.shape == (batch, output_dim), f"bad shape {out.shape}"
    # bf16 MXU inputs => loosened tolerance vs the fp32 reference.
    assert jnp.allclose(out, ref, atol=3e-2, rtol=3e-2), "mismatch vs reference"

    # TODO(synk): REDQ-ensemble fusion (stacked (E, in, out) weights with a leading
    # "parallel" ensemble grid axis and pl.Squeezed() weight block dims) would run all
    # E critics in one pallas_call, but is beyond this single-module forward.

    print("KERNEL_OK")
</pallas_src>

<mosaic_0001>
module attributes {stable_mosaic.version = 11 : i64} {
  func.func @mlp_kernel(%arg0: i32, %arg1: memref<256x16xbf16, #tpu.memory_space<vmem>>, %arg2: memref<16x256xbf16, #tpu.memory_space<vmem>>, %arg3: memref<1x256xf32, #tpu.memory_space<vmem>>, %arg4: memref<256x256xbf16, #tpu.memory_space<vmem>>, %arg5: memref<1x256xf32, #tpu.memory_space<vmem>>, %arg6: memref<256x4xbf16, #tpu.memory_space<vmem>>, %arg7: memref<1x4xf32, #tpu.memory_space<vmem>>, %arg8: memref<256x4xf32, #tpu.memory_space<vmem>>) attributes {dimension_semantics = [#tpu.dimension_semantics<parallel>], iteration_bounds = array<i64: 2>, scalar_prefetch = 0 : i64, scratch_operands = 0 : i64, tpu.core_type = #tpu.core_type<tc>, window_params = [{transform_indices = @transform_0, window_bounds = array<i64: 256, 16>}, {pipeline_mode = #tpu.pipeline_mode<synchronous>, transform_indices = @transform_1, window_bounds = array<i64: 16, 256>}, {pipeline_mode = #tpu.pipeline_mode<synchronous>, transform_indices = @transform_2, window_bounds = array<i64: 1, 256>}, {pipeline_mode = #tpu.pipeline_mode<synchronous>, transform_indices = @transform_3, window_bounds = array<i64: 256, 256>}, {pipeline_mode = #tpu.pipeline_mode<synchronous>, transform_indices = @transform_4, window_bounds = array<i64: 1, 256>}, {pipeline_mode = #tpu.pipeline_mode<synchronous>, transform_indices = @transform_5, window_bounds = array<i64: 256, 4>}, {pipeline_mode = #tpu.pipeline_mode<synchronous>, transform_indices = @transform_6, window_bounds = array<i64: 1, 4>}, {transform_indices = @transform_7, window_bounds = array<i64: 256, 4>}]} {
    %c0 = arith.constant 0 : index
    %c0_0 = arith.constant 0 : index
    %0 = vector.load %arg1[%c0, %c0_0] : memref<256x16xbf16, #tpu.memory_space<vmem>>, vector<256x16xbf16>
    %c0_1 = arith.constant 0 : index
    %c0_2 = arith.constant 0 : index
    %1 = vector.load %arg2[%c0_1, %c0_2] : memref<16x256xbf16, #tpu.memory_space<vmem>>, vector<16x256xbf16>
    %cst = arith.constant dense<0.000000e+00> : vector<256x256xf32>
    %2 = tpu.matmul %0, %1, %cst {dimension_numbers = #tpu.dot_dimension_numbers<[1], [0], [0], [1], [0, 0, 1, 1], [], []>} : vector<256x16xbf16>, vector<16x256xbf16>, vector<256x256xf32> -> vector<256x256xf32>
    %c0_3 = arith.constant 0 : index
    %c0_4 = arith.constant 0 : index
    %3 = vector.load %arg3[%c0_3, %c0_4] : memref<1x256xf32, #tpu.memory_space<vmem>>, vector<1x256xf32>
    %4 = vector.broadcast %3 : vector<1x256xf32> to vector<256x256xf32>
    %5 = arith.addf %2, %4 : vector<256x256xf32>
    %cst_5 = arith.constant 0.000000e+00 : f32
    %6 = vector.broadcast %cst_5 : f32 to vector<256x256xf32>
    %7 = arith.maximumf %5, %6 : vector<256x256xf32>
    %8 = arith.truncf %7 : vector<256x256xf32> to vector<256x256xbf16>
    %c0_6 = arith.constant 0 : index
    %c0_7 = arith.constant 0 : index
    %9 = vector.load %arg4[%c0_6, %c0_7] : memref<256x256xbf16, #tpu.memory_space<vmem>>, vector<256x256xbf16>
    %cst_8 = arith.constant dense<0.000000e+00> : vector<256x256xf32>
    %10 = tpu.matmul %8, %9, %cst_8 {dimension_numbers = #tpu.dot_dimension_numbers<[1], [0], [0], [1], [0, 0, 1, 1], [], []>} : vector<256x256xbf16>, vector<256x256xbf16>, vector<256x256xf32> -> vector<256x256xf32>
    %c0_9 = arith.constant 0 : index
    %c0_10 = arith.constant 0 : index
    %11 = vector.load %arg5[%c0_9, %c0_10] : memref<1x256xf32, #tpu.memory_space<vmem>>, vector<1x256xf32>
    %12 = vector.broadcast %11 : vector<1x256xf32> to vector<256x256xf32>
    %13 = arith.addf %10, %12 : vector<256x256xf32>
    %cst_11 = arith.constant 0.000000e+00 : f32
    %14 = vector.broadcast %cst_11 : f32 to vector<256x256xf32>
    %15 = arith.maximumf %13, %14 : vector<256x256xf32>
    %16 = arith.truncf %15 : vector<256x256xf32> to vector<256x256xbf16>
    %c0_12 = arith.constant 0 : index
    %c0_13 = arith.constant 0 : index
    %17 = vector.load %arg6[%c0_12, %c0_13] : memref<256x4xbf16, #tpu.memory_space<vmem>>, vector<256x4xbf16>
    %cst_14 = arith.constant dense<0.000000e+00> : vector<256x4xf32>
    %18 = tpu.matmul %16, %17, %cst_14 {dimension_numbers = #tpu.dot_dimension_numbers<[1], [0], [0], [1], [0, 0, 1, 1], [], []>} : vector<256x256xbf16>, vector<256x4xbf16>, vector<256x4xf32> -> vector<256x4xf32>
    %c0_15 = arith.constant 0 : index
    %c0_16 = arith.constant 0 : index
    %19 = vector.load %arg7[%c0_15, %c0_16] : memref<1x4xf32, #tpu.memory_space<vmem>>, vector<1x4xf32>
    %20 = vector.broadcast %19 : vector<1x4xf32> to vector<256x4xf32>
    %21 = arith.addf %18, %20 : vector<256x4xf32>
    %c0_17 = arith.constant 0 : index
    %c0_18 = arith.constant 0 : index
    %22 = vector.load %arg8[%c0_17, %c0_18] : memref<256x4xf32, #tpu.memory_space<vmem>>, vector<256x4xf32>
    tpu.vector_store %arg8[%c0_17, %c0_18], %21 {strides = array<i32>} : memref<256x4xf32, #tpu.memory_space<vmem>>, vector<256x4xf32>,
    return
  }
  func.func @transform_0(%arg0: i32) -> (i32, i32) {
    %c0_i32 = arith.constant 0 : i32
    %c0_i32_0 = arith.constant 0 : i32
    return %arg0, %c0_i32 : i32, i32
  }
  func.func @transform_1(%arg0: i32) -> (i32, i32) {
    %c0_i32 = arith.constant 0 : i32
    %c0_i32_0 = arith.constant 0 : i32
    %c0_i32_1 = arith.constant 0 : i32
    return %c0_i32, %c0_i32_0 : i32, i32
  }
  func.func @transform_2(%arg0: i32) -> (i32, i32) {
    %c0_i32 = arith.constant 0 : i32
    %c0_i32_0 = arith.constant 0 : i32
    %c0_i32_1 = arith.constant 0 : i32
    return %c0_i32, %c0_i32_0 : i32, i32
  }
  func.func @transform_3(%arg0: i32) -> (i32, i32) {
    %c0_i32 = arith.constant 0 : i32
    %c0_i32_0 = arith.constant 0 : i32
    %c0_i32_1 = arith.constant 0 : i32
    return %c0_i32, %c0_i32_0 : i32, i32
  }
  func.func @transform_4(%arg0: i32) -> (i32, i32) {
    %c0_i32 = arith.constant 0 : i32
    %c0_i32_0 = arith.constant 0 : i32
    %c0_i32_1 = arith.constant 0 : i32
    return %c0_i32, %c0_i32_0 : i32, i32
  }
  func.func @transform_5(%arg0: i32) -> (i32, i32) {
    %c0_i32 = arith.constant 0 : i32
    %c0_i32_0 = arith.constant 0 : i32
    %c0_i32_1 = arith.constant 0 : i32
    return %c0_i32, %c0_i32_0 : i32, i32
  }
  func.func @transform_6(%arg0: i32) -> (i32, i32) {
    %c0_i32 = arith.constant 0 : i32
    %c0_i32_0 = arith.constant 0 : i32
    %c0_i32_1 = arith.constant 0 : i32
    return %c0_i32, %c0_i32_0 : i32, i32
  }
  func.func @transform_7(%arg0: i32) -> (i32, i32) {
    %c0_i32 = arith.constant 0 : i32
    %c0_i32_0 = arith.constant 0 : i32
    return %arg0, %c0_i32 : i32, i32
  }
}

</mosaic_0001>

<llo_original>
// kernel: mlp_forward.1
$region0: #{mlp_forward.1}
  #allocation0 [shape = 'u32[]', space=smem, size = 0x4, offset = 0x4, fixed_abs, tag = 'smem constant byte address 0x4 - core index']
  #allocation1 [shape = 'u32[144,128]{1,0:T(1,128)}', space=vmem, size = 0x12000, scoped, tag = 'internal scratch']
  %s0 = inlined_call_operand.vmem [shape: bf16[512,16], index: 0, kind: input, shape index: {}]
  %s1 = inlined_call_operand.vmem [shape: bf16[16,256], index: 1, kind: input, shape index: {}]
  %s2 = inlined_call_operand.vmem [shape: f32[1,256], index: 2, kind: input, shape index: {}]
  %s3 = inlined_call_operand.vmem [shape: bf16[256,256], index: 3, kind: input, shape index: {}]
  %s4 = inlined_call_operand.vmem [shape: f32[1,256], index: 4, kind: input, shape index: {}]
  %s5 = inlined_call_operand.vmem [shape: bf16[256,4], index: 5, kind: input, shape index: {}]
  %s6 = inlined_call_operand.vmem [shape: f32[1,4], index: 6, kind: input, shape index: {}]
  %s7 = inlined_call_operand.vmem [shape: f32[512,4], index: 7, kind: output, shape index: {}]
  %s8 = sld [smem:[#allocation0]]
  $region61: #{mlp_forward.1} parent=0
    _
  %s10 = ssub.s32 1, %s8
  %s11 = scalar_select 0, %s10, %s8
  loop: start=0, step=1, limit=4
  $region2: #{mlp_forward.1} parent=0 // loop_pre_header
    _
  $region3: #{mlp_forward.1} parent=0 // loop_header
    %s13 = sphi 0, %s17
    %p14 = scmp.ge.s32.totalorder %s13, 4
    %s23 = sphi 0, %s25
    %s26 = sphi 0, %s23
    %s27 = sphi 0, %s26
    %s43 = sphi 0, %s27
    %s47 = sphi 0, %s47
    %s49 = sphi 0, %s47
    %s50 = sphi 0, %s49
    %s64 = sphi 0, %s50
    %s68 = sphi 0, %s68
    %s70 = sphi 0, %s68
    %s71 = sphi 0, %s70
    %s85 = sphi 0, %s71
    %s89 = sphi 0, %s89
    %s91 = sphi 0, %s89
    %s92 = sphi 0, %s91
    %s106 = sphi 0, %s92
    %s110 = sphi 0, %s110
    %s112 = sphi 0, %s110
    %s113 = sphi 0, %s112
    %s127 = sphi 0, %s113
    %s131 = sphi 0, %s131
    %s133 = sphi 0, %s131
    %s134 = sphi 0, %s133
    %s148 = sphi 0, %s134
    %s152 = sphi 0, %s152
    %s154 = sphi 0, %s152
    %s155 = sphi 0, %s154
    %s169 = sphi 0, %s155
    %s175 = sphi 0, %s177
    %s178 = sphi 0, %s175
    %s179 = sphi 0, %s178
    %s195 = sphi 0, %s179
  $region4: #{mlp_forward.1} parent=0 // loop_header_branch
    %16 = sbr.rel (%p14) target = $region8
  $region5: #{mlp_forward.1} parent=0 // loop_body
    %s18 = ssub.s32 %s13, 1
    %s19 = ssub.s32 %s13, 2
    %s20 = sadd.s32 %s13, 1
    %s21 = ssub.s32 %s13, %s20
    %p22 = scmp.eq.s32.totalorder %s21, 0
    %s24 = sadd.s32 %s23, 1
    %s25 = scalar_select %p22, %s23, %s24
    %p28 = pneg %p22
    %p29 = scmp.eq.s32.totalorder %s13, 1
    %p30 = por %p28, %p29
    %p31 = scmp.ne.s32.totalorder %s23, %s26
    %p32 = scmp.eq.s32.totalorder %s13, 0
    %p33 = por %p31, %p32
    %p34 = scmp.ne.s32.totalorder %s23, %s26
    %p35 = scmp.eq.s32.totalorder %s18, 1
    %p36 = por %p34, %p35
    %p37 = scmp.ne.s32.totalorder %s26, %s27
    %p38 = scmp.eq.s32.totalorder %s18, 0
    %p39 = por %p37, %p38
    %p40 = scmp.ne.s32.totalorder %s26, %s27
    %p41 = scmp.eq.s32.totalorder %s19, 1
    %p42 = por %p40, %p41
    %p44 = scmp.ne.s32.totalorder %s27, %s43
    %p45 = scmp.eq.s32.totalorder %s19, 0
    %p46 = por %p44, %p45
    %s48 = sadd.s32 %s47, 1
    %p51 = scmp.eq.s32.totalorder %s13, 1
    %p52 = scmp.ne.s32.totalorder %s47, %s49
    %p53 = scmp.eq.s32.totalorder %s13, 0
    %p54 = por %p52, %p53
    %p55 = scmp.ne.s32.totalorder %s47, %s49
    %p56 = scmp.eq.s32.totalorder %s18, 1
    %p57 = por %p55, %p56
    %p58 = scmp.ne.s32.totalorder %s49, %s50
    %p59 = scmp.eq.s32.totalorder %s18, 0
    %p60 = por %p58, %p59
    %p61 = scmp.ne.s32.totalorder %s49, %s50
    %p62 = scmp.eq.s32.totalorder %s19, 1
    %p63 = por %p61, %p62
    %p65 = scmp.ne.s32.totalorder %s50, %s64
    %p66 = scmp.eq.s32.totalorder %s19, 0
    %p67 = por %p65, %p66
    %s69 = sadd.s32 %s68, 1
    %p72 = scmp.eq.s32.totalorder %s13, 1
    %p73 = scmp.ne.s32.totalorder %s68, %s70
    %p74 = scmp.eq.s32.totalorder %s13, 0
    %p75 = por %p73, %p74
    %p76 = scmp.ne.s32.totalorder %s68, %s70
    %p77 = scmp.eq.s32.totalorder %s18, 1
    %p78 = por %p76, %p77
    %p79 = scmp.ne.s32.totalorder %s70, %s71
    %p80 = scmp.eq.s32.totalorder %s18, 0
    %p81 = por %p79, %p80
    %p82 = scmp.ne.s32.totalorder %s70, %s71
    %p83 = scmp.eq.s32.totalorder %s19, 1
    %p84 = por %p82, %p83
    %p86 = scmp.ne.s32.totalorder %s71, %s85
    %p87 = scmp.eq.s32.totalorder %s19, 0
    %p88 = por %p86, %p87
    %s90 = sadd.s32 %s89, 1
    %p93 = scmp.eq.s32.totalorder %s13, 1
    %p94 = scmp.ne.s32.totalorder %s89, %s91
    %p95 = scmp.eq.s32.totalorder %s13, 0
    %p96 = por %p94, %p95
    %p97 = scmp.ne.s32.totalorder %s89, %s91
    %p98 = scmp.eq.s32.totalorder %s18, 1
    %p99 = por %p97, %p98
    %p100 = scmp.ne.s32.totalorder %s91, %s92
    %p101 = scmp.eq.s32.totalorder %s18, 0
    %p102 = por %p100, %p101
    %p103 = scmp.ne.s32.totalorder %s91, %s92
    %p104 = scmp.eq.s32.totalorder %s19, 1
    %p105 = por %p103, %p104
    %p107 = scmp.ne.s32.totalorder %s92, %s106
    %p108 = scmp.eq.s32.totalorder %s19, 0
    %p109 = por %p107, %p108
    %s111 = sadd.s32 %s110, 1
    %p114 = scmp.eq.s32.totalorder %s13, 1
    %p115 = scmp.ne.s32.totalorder %s110, %s112
    %p116 = scmp.eq.s32.totalorder %s13, 0
    %p117 = por %p115, %p116
    %p118 = scmp.ne.s32.totalorder %s110, %s112
    %p119 = scmp.eq.s32.totalorder %s18, 1
    %p120 = por %p118, %p119
    %p121 = scmp.ne.s32.totalorder %s112, %s113
    %p122 = scmp.eq.s32.totalorder %s18, 0
    %p123 = por %p121, %p122
    %p124 = scmp.ne.s32.totalorder %s112, %s113
    %p125 = scmp.eq.s32.totalorder %s19, 1
    %p126 = por %p124, %p125
    %p128 = scmp.ne.s32.totalorder %s113, %s127
    %p129 = scmp.eq.s32.totalorder %s19, 0
    %p130 = por %p128, %p129
    %s132 = sadd.s32 %s131, 1
    %p135 = scmp.eq.s32.totalorder %s13, 1
    %p136 = scmp.ne.s32.totalorder %s131, %s133
    %p137 = scmp.eq.s32.totalorder %s13, 0
    %p138 = por %p136, %p137
    %p139 = scmp.ne.s32.totalorder %s131, %s133
    %p140 = scmp.eq.s32.totalorder %s18, 1
    %p141 = por %p139, %p140
    %p142 = scmp.ne.s32.totalorder %s133, %s134
    %p143 = scmp.eq.s32.totalorder %s18, 0
    %p144 = por %p142, %p143
    %p145 = scmp.ne.s32.totalorder %s133, %s134
    %p146 = scmp.eq.s32.totalorder %s19, 1
    %p147 = por %p145, %p146
    %p149 = scmp.ne.s32.totalorder %s134, %s148
    %p150 = scmp.eq.s32.totalorder %s19, 0
    %p151 = por %p149, %p150
    %s153 = sadd.s32 %s152, 1
    %p156 = scmp.eq.s32.totalorder %s13, 1
    %p157 = scmp.ne.s32.totalorder %s152, %s154
    %p158 = scmp.eq.s32.totalorder %s13, 0
    %p159 = por %p157, %p158
    %p160 = scmp.ne.s32.totalorder %s152, %s154
    %p161 = scmp.eq.s32.totalorder %s18, 1
    %p162 = por %p160, %p161
    %p163 = scmp.ne.s32.totalorder %s154, %s155
    %p164 = scmp.eq.s32.totalorder %s18, 0
    %p165 = por %p163, %p164
    %p166 = scmp.ne.s32.totalorder %s154, %s155
    %p167 = scmp.eq.s32.totalorder %s19, 1
    %p168 = por %p166, %p167
    %p170 = scmp.ne.s32.totalorder %s155, %s169
    %p171 = scmp.eq.s32.totalorder %s19, 0
    %p172 = por %p170, %p171
    %s173 = ssub.s32 %s13, %s20
    %p174 = scmp.eq.s32.totalorder %s173, 0
    %s176 = sadd.s32 %s175, 1
    %s177 = scalar_select %p174, %s175, %s176
    %p180 = pneg %p174
    %p181 = scmp.eq.s32.totalorder %s13, 1
    %p182 = por %p180, %p181
    %p183 = scmp.ne.s32.totalorder %s175, %s178
    %p184 = scmp.eq.s32.totalorder %s13, 0
    %p185 = por %p183, %p184
    %p186 = scmp.ne.s32.totalorder %s175, %s178
    %p187 = scmp.eq.s32.totalorder %s18, 1
    %p188 = por %p186, %p187
    %p189 = scmp.ne.s32.totalorder %s178, %s179
    %p190 = scmp.eq.s32.totalorder %s18, 0
    %p191 = por %p189, %p190
    %p192 = scmp.ne.s32.totalorder %s178, %s179
    %p193 = scmp.eq.s32.totalorder %s19, 1
    %p194 = por %p192, %p193
    %p196 = scmp.ne.s32.totalorder %s179, %s195
    %p197 = scmp.eq.s32.totalorder %s19, 0
    %p198 = por %p196, %p197
    %p199 = scmp.le.s32.totalorder 1, %s13
    %p200 = scmp.lt.s32.totalorder %s13, 3
    %p201 = pnand %p199, %p200
    %p202 = pneg %p201
    // Predicated region
    $region9: #{mlp_forward.1} parent=5 // pred_check
      _
    $region10: #{mlp_forward.1} parent=5 // pred_check_branch
      %204 = sbr.rel (%p201) target = $region12
    $region11: #{mlp_forward.1} parent=5 // pred_region
      %s205 = ssub.s32 %s13, 1
      // Predicated region
      $region13: #{mlp_forward.1} parent=11 // pred_check
        %p206 = pneg %p60
      $region14: #{mlp_forward.1} parent=11 // pred_check_branch
        %208 = sbr.rel (%p206) target = $region16
      $region15: #{mlp_forward.1} parent=11 // pred_region
        _
      $region16: #{mlp_forward.1} parent=11 // pred_fallthru
        _
      // Predicated region
      $region17: #{mlp_forward.1} parent=11 // pred_check
        %p209 = pneg %p81
      $region18: #{mlp_forward.1} parent=11 // pred_check_branch
        %211 = sbr.rel (%p209) target = $region20
      $region19: #{mlp_forward.1} parent=11 // pred_region
        _
      $region20: #{mlp_forward.1} parent=11 // pred_fallthru
        _
      // Predicated region
      $region21: #{mlp_forward.1} parent=11 // pred_check
        %p212 = pneg %p102
      $region22: #{mlp_forward.1} parent=11 // pred_check_branch
        %214 = sbr.rel (%p212) target = $region24
      $region23: #{mlp_forward.1} parent=11 // pred_region
        _
      $region24: #{mlp_forward.1} parent=11 // pred_fallthru
        _
      // Predicated region
      $region25: #{mlp_forward.1} parent=11 // pred_check
        %p215 = pneg %p123
      $region26: #{mlp_forward.1} parent=11 // pred_check_branch
        %217 = sbr.rel (%p215) target = $region28
      $region27: #{mlp_forward.1} parent=11 // pred_region
        _
      $region28: #{mlp_forward.1} parent=11 // pred_fallthru
        _
      // Predicated region
      $region29: #{mlp_forward.1} parent=11 // pred_check
        %p218 = pneg %p144
      $region30: #{mlp_forward.1} parent=11 // pred_check_branch
        %220 = sbr.rel (%p218) target = $region32
      $region31: #{mlp_forward.1} parent=11 // pred_region
        _
      $region32: #{mlp_forward.1} parent=11 // pred_fallthru
        _
      // Predicated region
      $region33: #{mlp_forward.1} parent=11 // pred_check
        %p221 = pneg %p165
      $region34: #{mlp_forward.1} parent=11 // pred_check_branch
        %223 = sbr.rel (%p221) target = $region36
      $region35: #{mlp_forward.1} parent=11 // pred_region
        _
      $region36: #{mlp_forward.1} parent=11 // pred_fallthru
        _
    $region12: #{mlp_forward.1} parent=5 // pred_fallthru
      _
    %p224 = scmp.lt.s32.totalorder %s13, 2
    // Predicated region
    $region37: #{mlp_forward.1} parent=5 // pred_check
      %p225 = pneg %p224
    $region38: #{mlp_forward.1} parent=5 // pred_check_branch
      %227 = sbr.rel (%p225) target = $region40
    $region39: #{mlp_forward.1} parent=5 // pred_region
      // Predicated region
      $region41: #{mlp_forward.1} parent=39 // pred_check
        %p228 = pneg %p33
      $region42: #{mlp_forward.1} parent=39 // pred_check_branch
        %230 = sbr.rel (%p228) target = $region44
      $region43: #{mlp_forward.1} parent=39 // pred_region
        %s231 = smul.u32 32, %s13
        %p232 = scmp.lt.s32.totalorder %s231, 63
        %s233 = scalar_select %p232, %s231, 63
        %s234 = smul.addr %s233, 4
        %s235 = scalar_lea.vmem %s0, %s234
        %s236 = smul.u32 32, %s13
      $region44: #{mlp_forward.1} parent=39 // pred_fallthru
        _
    $region40: #{mlp_forward.1} parent=5 // pred_fallthru
      _
    %p237 = scmp.le.s32.totalorder 1, %s13
    %p238 = scmp.lt.s32.totalorder %s13, 3
    %p239 = pnand %p237, %p238
    %p240 = pneg %p239
    // Predicated region
    $region45: #{mlp_forward.1} parent=5 // pred_check
      _
    $region46: #{mlp_forward.1} parent=5 // pred_check_branch
      %242 = sbr.rel (%p239) target = $region48
    $region47: #{mlp_forward.1} parent=5 // pred_region
      %s243 = ssub.s32 %s13, 1
      %s244 = smul.u32 32, %s18
      %p245 = scmp.lt.s32.totalorder %s244, 63
      %s246 = scalar_select %p245, %s244, 63
      %s247 = smul.addr %s246, 4
      %s248 = scalar_lea.vmem %s0, %s247
      %p249 = pneg %p39
      %p250 = pneg %p36
      %p251 = pneg %p60
      %p252 = pneg %p57
      %p253 = pneg %p81
      %p254 = pneg %p78
      %p255 = pneg %p102
      %p256 = pneg %p99
      %p257 = pneg %p123
      %p258 = pneg %p120
      %p259 = pneg %p144
      %p260 = pneg %p141
      %p261 = pneg %p165
      %p262 = pneg %p162
      %p263 = pneg %p191
      %p264 = pneg %p188
      %s265 = smul.u32 32, %s18
      %p266 = scmp.lt.s32.totalorder %s265, 63
      %s267 = scalar_select %p266, %s265, 63
      %s268 = smul.addr %s267, 8
      %s269 = scalar_lea.vmem %s7, %s268
      %s270 = smul.u32 32, %s18
      %p271 = scmp.lt.s32.totalorder %s270, 63
      %s272 = scalar_select %p271, %s270, 63
      %s273 = smul.addr %s272, 4
      %s274 = scalar_lea.vmem %s0, %s273
      %s275 = smul.u32 32, %s18
      %s276 = smul.u32 32, %s18
      %p277 = scmp.lt.s32.totalorder %s276, 63
      %s278 = scalar_select %p277, %s276, 63
      %s279 = smul.addr %s278, 8
      %s280 = scalar_lea.vmem %s7, %s279
      %s281 = smul.u32 32, %s18
      %v283 = vld [vmem:[%s274] sm:$0xf]
      %v284 = vld [vmem:[%s274 + $0x4] sm:$0xf]
      %v285 = vld [vmem:[%s274 + $0x8] sm:$0xf]
      %v286 = vld [vmem:[%s274 + $0xc] sm:$0xf]
      %v287 = vld [vmem:[%s274 + $0x10] sm:$0xf]
      %v288 = vld [vmem:[%s274 + $0x14] sm:$0xf]
      %v289 = vld [vmem:[%s274 + $0x18] sm:$0xf]
      %v290 = vld [vmem:[%s274 + $0x1c] sm:$0xf]
      %v291 = vld [vmem:[%s274 + $0x20] sm:$0xf]
      %v292 = vld [vmem:[%s274 + $0x24] sm:$0xf]
      %v293 = vld [vmem:[%s274 + $0x28] sm:$0xf]
      %v294 = vld [vmem:[%s274 + $0x2c] sm:$0xf]
      %v295 = vld [vmem:[%s274 + $0x30] sm:$0xf]
      %v296 = vld [vmem:[%s274 + $0x34] sm:$0xf]
      %v297 = vld [vmem:[%s274 + $0x38] sm:$0xf]
      %v298 = vld [vmem:[%s274 + $0x3c] sm:$0xf]
      %v299 = vld [vmem:[%s274 + $0x40] sm:$0xf]
      %v300 = vld [vmem:[%s274 + $0x44] sm:$0xf]
      %v301 = vld [vmem:[%s274 + $0x48] sm:$0xf]
      %v302 = vld [vmem:[%s274 + $0x4c] sm:$0xf]
      %v303 = vld [vmem:[%s274 + $0x50] sm:$0xf]
      %v304 = vld [vmem:[%s274 + $0x54] sm:$0xf]
      %v305 = vld [vmem:[%s274 + $0x58] sm:$0xf]
      %v306 = vld [vmem:[%s274 + $0x5c] sm:$0xf]
      %v307 = vld [vmem:[%s274 + $0x60] sm:$0xf]
      %v308 = vld [vmem:[%s274 + $0x64] sm:$0xf]
      %v309 = vld [vmem:[%s274 + $0x68] sm:$0xf]
      %v310 = vld [vmem:[%s274 + $0x6c] sm:$0xf]
      %v311 = vld [vmem:[%s274 + $0x70] sm:$0xf]
      %v312 = vld [vmem:[%s274 + $0x74] sm:$0xf]
      %v313 = vld [vmem:[%s274 + $0x78] sm:$0xf]
      %v314 = vld [vmem:[%s274 + $0x7c] sm:$0xf]
      %v315 = vld [vmem:[%s1] sm:$0xff]
      %v316 = vld [vmem:[%s1 + $0x8] sm:$0xff]
      %v317 = vld [vmem:[%s2] sm:$0x3]
      %v319 = vlaneseq
      %v320 = vshrl.u32 %v319, 7
      %v321 = vsub.s32 0, %v320
      %v322 = vrot.slane %v317, %v321
      %v323 = vlaneseq
      %v324 = vshrl.u32 %v323, 7
      %v325 = vsub.s32 1, %v324
      %v326 = vrot.slane %v317, %v325
      %v361 = vunpack.c.l.b16 %v283
      %v362 = vunpack.c.l.b16 %v284
      %v363 = vunpack.c.l.b16 %v285
      %v364 = vunpack.c.l.b16 %v286
      %v365 = vunpack.c.l.b16 %v287
      %v366 = vunpack.c.l.b16 %v288
      %v367 = vunpack.c.l.b16 %v289
      %v368 = vunpack.c.l.b16 %v290
      %v369 = vunpack.c.l.b16 %v291
      %v370 = vunpack.c.l.b16 %v292
      %v371 = vunpack.c.l.b16 %v293
      %v372 = vunpack.c.l.b16 %v294
      %v373 = vunpack.c.l.b16 %v295
      %v374 = vunpack.c.l.b16 %v296
      %v375 = vunpack.c.l.b16 %v297
      %v376 = vunpack.c.l.b16 %v298
      %v377 = vunpack.c.l.b16 %v299
      %v378 = vunpack.c.l.b16 %v300
      %v379 = vunpack.c.l.b16 %v301
      %v380 = vunpack.c.l.b16 %v302
      %v381 = vunpack.c.l.b16 %v303
      %v382 = vunpack.c.l.b16 %v304
      %v383 = vunpack.c.l.b16 %v305
      %v384 = vunpack.c.l.b16 %v306
      %v385 = vunpack.c.l.b16 %v307
      %v386 = vunpack.c.l.b16 %v308
      %v387 = vunpack.c.l.b16 %v309
      %v388 = vunpack.c.l.b16 %v310
      %v389 = vunpack.c.l.b16 %v311
      %v390 = vunpack.c.l.b16 %v312
      %v391 = vunpack.c.l.b16 %v313
      %v392 = vunpack.c.l.b16 %v314
      %v393 = vpack.c.b16 %v362, %v361
      %v394 = vpack.c.b16 %v364, %v363
      %v395 = vpack.c.b16 %v366, %v365
      %v396 = vpack.c.b16 %v368, %v367
      %v397 = vpack.c.b16 %v370, %v369
      %v398 = vpack.c.b16 %v372, %v371
      %v399 = vpack.c.b16 %v374, %v373
      %v400 = vpack.c.b16 %v376, %v375
      %v401 = vpack.c.b16 %v378, %v377
      %v402 = vpack.c.b16 %v380, %v379
      %v403 = vpack.c.b16 %v382, %v381
      %v404 = vpack.c.b16 %v384, %v383
      %v405 = vpack.c.b16 %v386, %v385
      %v406 = vpack.c.b16 %v388, %v387
      %v407 = vpack.c.b16 %v390, %v389
      %v408 = vpack.c.b16 %v392, %v391
      %v411 = vunpack.c.l.b16 %v315
      %v412 = vunpack.c.h.b16 %v315
      %v413 = vunpack.c.l.b16 %v316
      %v414 = vunpack.c.h.b16 %v316
      %v415 = vpack.c.b16 %v413, %v411
      %v416 = vpack.c.b16 %v414, %v412
      %vm419 = vcmask 130048
      %v421 = vsel %vm419, %v393, 0
      %v424 = vsel %vm419, %v394, 0
      %v427 = vsel %vm419, %v395, 0
      %v430 = vsel %vm419, %v396, 0
      %v433 = vsel %vm419, %v397, 0
      %v436 = vsel %vm419, %v398, 0
      %v439 = vsel %vm419, %v399, 0
      %v442 = vsel %vm419, %v400, 0
      %v445 = vsel %vm419, %v401, 0
      %v448 = vsel %vm419, %v402, 0
      %v451 = vsel %vm419, %v403, 0
      %v454 = vsel %vm419, %v404, 0
      %v457 = vsel %vm419, %v405, 0
      %v460 = vsel %vm419, %v406, 0
      %v463 = vsel %vm419, %v407, 0
      %v466 = vsel %vm419, %v408, 0
      %468 = vmatprep.subr.bf16.mxu0 %v416
      %469 = vmatpush1.bf16.msra.mxu0 %v415
      %470 = vmatprep.subr.bf16.mxu0 0
      %471 = vmatpush1.bf16.msra.mxu0 0
      %472 = vmatprep.subr.bf16.mxu0 0
      %473 = vmatpush1.bf16.msra.mxu0 0
      %474 = vmatprep.subr.bf16.mxu0 0
      %475 = vmatpush1.bf16.msra.mxu0 0
      %476 = vmatprep.subr.bf16.mxu0 0
      %477 = vmatpush1.bf16.msra.mxu0 0
      %478 = vmatprep.subr.bf16.mxu0 0
      %479 = vmatpush1.bf16.msra.mxu0 0
      %480 = vmatprep.subr.bf16.mxu0 0
      %481 = vmatpush1.bf16.msra.mxu0 0
      %482 = vmatprep.subr.bf16.mxu0 0
      %483 = vmatpush1.bf16.msra.mxu0 0
      %484 = vmatprep.subr.bf16.mxu0 0
      %485 = vmatpush1.bf16.msra.mxu0 0
      %486 = vmatprep.subr.bf16.mxu0 0
      %487 = vmatpush1.bf16.msra.mxu0 0
      %488 = vmatprep.subr.bf16.mxu0 0
      %489 = vmatpush1.bf16.msra.mxu0 0
      %490 = vmatprep.subr.bf16.mxu0 0
      %491 = vmatpush1.bf16.msra.mxu0 0
      %492 = vmatprep.subr.bf16.mxu0 0
      %493 = vmatpush1.bf16.msra.mxu0 0
      %494 = vmatprep.subr.bf16.mxu0 0
      %495 = vmatpush1.bf16.msra.mxu0 0
      %496 = vmatprep.subr.bf16.mxu0 0
      %497 = vmatpush1.bf16.msra.mxu0 0
      %498 = vmatprep.subr.bf16.mxu0 0
      %499 = vmatpush1.bf16.msra.mxu0 0
      %500 = vmatprep.mubr.bf16.mxu0 0
      %501 = vmatmul.mubr.bf16.gmra.mrb[0].mxu0 %v421
      %v502 = vpop.f32.mrb[0].mxu0
      %v503 = vadd.f32 %v322, %v502
      %v504 = vpop.f32.mrb[0].mxu0
      %v505 = vadd.f32 %v326, %v504
      %v506 = vpop.f32.mrb[0].mxu0
      %v507 = vadd.f32 %v322, %v506
      %v508 = vpop.f32.mrb[0].mxu0
      %v509 = vadd.f32 %v326, %v508
      %510 = vmatprep.mubr.bf16.mxu0 0
      %511 = vmatmul.mubr.bf16.gmra.mrb[0].mxu0 %v424
      %v512 = vpop.f32.mrb[0].mxu0
      %v513 = vadd.f32 %v322, %v512
      %v514 = vpop.f32.mrb[0].mxu0
      %v515 = vadd.f32 %v326, %v514
      %v516 = vpop.f32.mrb[0].mxu0
      %v517 = vadd.f32 %v322, %v516
      %v518 = vpop.f32.mrb[0].mxu0
      %v519 = vadd.f32 %v326, %v518
      %520 = vmatprep.mubr.bf16.mxu0 0
      %521 = vmatmul.mubr.bf16.gmra.mrb[0].mxu0 %v427
      %v522 = vpop.f32.mrb[0].mxu0
      %v523 = vadd.f32 %v322, %v522
      %v524 = vpop.f32.mrb[0].mxu0
      %v525 = vadd.f32 %v326, %v524
      %v526 = vpop.f32.mrb[0].mxu0
      %v527 = vadd.f32 %v322, %v526
      %v528 = vpop.f32.mrb[0].mxu0
      %v529 = vadd.f32 %v326, %v528
      %530 = vmatprep.mubr.bf16.mxu0 0
      %531 = vmatmul.mubr.bf16.gmra.mrb[0].mxu0 %v430
      %v532 = vpop.f32.mrb[0].mxu0
      %v533 = vadd.f32 %v322, %v532
      %v534 = vpop.f32.mrb[0].mxu0
      %v535 = vadd.f32 %v326, %v534
      %v536 = vpop.f32.mrb[0].mxu0
      %v537 = vadd.f32 %v322, %v536
      %v538 = vpop.f32.mrb[0].mxu0
      %v539 = vadd.f32 %v326, %v538
      %540 = vmatprep.mubr.bf16.mxu0 0
      %541 = vmatmul.mubr.bf16.gmra.mrb[0].mxu0 %v433
      %v542 = vpop.f32.mrb[0].mxu0
      %v543 = vadd.f32 %v322, %v542
      %v544 = vpop.f32.mrb[0].mxu0
      %v545 = vadd.f32 %v326, %v544
      %v546 = vpop.f32.mrb[0].mxu0
      %v547 = vadd.f32 %v322, %v546
      %v548 = vpop.f32.mrb[0].mxu0
      %v549 = vadd.f32 %v326, %v548
      %550 = vmatprep.mubr.bf16.mxu0 0
      %551 = vmatmul.mubr.bf16.gmra.mrb[0].mxu0 %v436
      %v552 = vpop.f32.mrb[0].mxu0
      %v553 = vadd.f32 %v322, %v552
      %v554 = vpop.f32.mrb[0].mxu0
      %v555 = vadd.f32 %v326, %v554
      %v556 = vpop.f32.mrb[0].mxu0
      %v557 = vadd.f32 %v322, %v556
      %v558 = vpop.f32.mrb[0].mxu0
      %v559 = vadd.f32 %v326, %v558
      %560 = vmatprep.mubr.bf16.mxu0 0
      %561 = vmatmul.mubr.bf16.gmra.mrb[0].mxu0 %v439
      %v562 = vpop.f32.mrb[0].mxu0
      %v563 = vadd.f32 %v322, %v562
      %v564 = vpop.f32.mrb[0].mxu0
      %v565 = vadd.f32 %v326, %v564
      %v566 = vpop.f32.mrb[0].mxu0
      %v567 = vadd.f32 %v322, %v566
      %v568 = vpop.f32.mrb[0].mxu0
      %v569 = vadd.f32 %v326, %v568
      %570 = vmatprep.mubr.bf16.mxu0 0
      %571 = vmatmul.mubr.bf16.gmra.mrb[0].mxu0 %v442
      %v572 = vpop.f32.mrb[0].mxu0
      %v573 = vadd.f32 %v322, %v572
      %v574 = vpop.f32.mrb[0].mxu0
      %v575 = vadd.f32 %v326, %v574
      %v576 = vpop.f32.mrb[0].mxu0
      %v577 = vadd.f32 %v322, %v576
      %v578 = vpop.f32.mrb[0].mxu0
      %v579 = vadd.f32 %v326, %v578
      %580 = vmatprep.mubr.bf16.mxu0 0
      %581 = vmatmul.mubr.bf16.gmra.mrb[0].mxu0 %v445
      %v582 = vpop.f32.mrb[0].mxu0
      %v583 = vadd.f32 %v322, %v582
      %v584 = vpop.f32.mrb[0].mxu0
      %v585 = vadd.f32 %v326, %v584
      %v586 = vpop.f32.mrb[0].mxu0
      %v587 = vadd.f32 %v322, %v586
      %v588 = vpop.f32.mrb[0].mxu0
      %v589 = vadd.f32 %v326, %v588
      %590 = vmatprep.mubr.bf16.mxu0 0
      %591 = vmatmul.mubr.bf16.gmra.mrb[0].mxu0 %v448
      %v592 = vpop.f32.mrb[0].mxu0
      %v593 = vadd.f32 %v322, %v592
      %v594 = vpop.f32.mrb[0].mxu0
      %v595 = vadd.f32 %v326, %v594
      %v596 = vpop.f32.mrb[0].mxu0
      %v597 = vadd.f32 %v322, %v596
      %v598 = vpop.f32.mrb[0].mxu0
      %v599 = vadd.f32 %v326, %v598
      %600 = vmatprep.mubr.bf16.mxu0 0
      %601 = vmatmul.mubr.bf16.gmra.mrb[0].mxu0 %v451
      %v602 = vpop.f32.mrb[0].mxu0
      %v603 = vadd.f32 %v322, %v602
      %v604 = vpop.f32.mrb[0].mxu0
      %v605 = vadd.f32 %v326, %v604
      %v606 = vpop.f32.mrb[0].mxu0
      %v607 = vadd.f32 %v322, %v606
      %v608 = vpop.f32.mrb[0].mxu0
      %v609 = vadd.f32 %v326, %v608
      %610 = vmatprep.mubr.bf16.mxu0 0
      %611 = vmatmul.mubr.bf16.gmra.mrb[0].mxu0 %v454
      %v612 = vpop.f32.mrb[0].mxu0
      %v613 = vadd.f32 %v322, %v612
      %v614 = vpop.f32.mrb[0].mxu0
      %v615 = vadd.f32 %v326, %v614
      %v616 = vpop.f32.mrb[0].mxu0
      %v617 = vadd.f32 %v322, %v616
      %v618 = vpop.f32.mrb[0].mxu0
      %v619 = vadd.f32 %v326, %v618
      %620 = vmatprep.mubr.bf16.mxu0 0
      %621 = vmatmul.mubr.bf16.gmra.mrb[0].mxu0 %v457
      %v622 = vpop.f32.mrb[0].mxu0
      %v623 = vadd.f32 %v322, %v622
      %v624 = vpop.f32.mrb[0].mxu0
      %v625 = vadd.f32 %v326, %v624
      %v626 = vpop.f32.mrb[0].mxu0
      %v627 = vadd.f32 %v322, %v626
      %v628 = vpop.f32.mrb[0].mxu0
      %v629 = vadd.f32 %v326, %v628
      %630 = vmatprep.mubr.bf16.mxu0 0
      %631 = vmatmul.mubr.bf16.gmra.mrb[0].mxu0 %v460
      %v632 = vpop.f32.mrb[0].mxu0
      %v633 = vadd.f32 %v322, %v632
      %v634 = vpop.f32.mrb[0].mxu0
      %v635 = vadd.f32 %v326, %v634
      %v636 = vpop.f32.mrb[0].mxu0
      %v637 = vadd.f32 %v322, %v636
      %v638 = vpop.f32.mrb[0].mxu0
      %v639 = vadd.f32 %v326, %v638
      %640 = vmatprep.mubr.bf16.mxu0 0
      %641 = vmatmul.mubr.bf16.gmra.mrb[0].mxu0 %v463
      %v642 = vpop.f32.mrb[0].mxu0
      %v643 = vadd.f32 %v322, %v642
      %v644 = vpop.f32.mrb[0].mxu0
      %v645 = vadd.f32 %v326, %v644
      %v646 = vpop.f32.mrb[0].mxu0
      %v647 = vadd.f32 %v322, %v646
      %v648 = vpop.f32.mrb[0].mxu0
      %v649 = vadd.f32 %v326, %v648
      %650 = vmatprep.mubr.bf16.mxu0 0
      %651 = vmatmul.mubr.bf16.gmra.mrb[0].mxu0 %v466
      %v652 = vpop.f32.mrb[0].mxu0
      %v653 = vadd.f32 %v322, %v652
      %v654 = vpop.f32.mrb[0].mxu0
      %v655 = vadd.f32 %v326, %v654
      %v656 = vpop.f32.mrb[0].mxu0
      %v657 = vadd.f32 %v322, %v656
      %v658 = vpop.f32.mrb[0].mxu0
      %v659 = vadd.f32 %v326, %v658
      %660 = vdwg.mxu0
      %v661 = vmax.f32 %v503, 0.0
      %v662 = vmax.f32 %v505, 0.0
      %v663 = vmax.f32 %v507, 0.0
      %v664 = vmax.f32 %v509, 0.0
      %v665 = vmax.f32 %v513, 0.0
      %v666 = vmax.f32 %v515, 0.0
      %v667 = vmax.f32 %v517, 0.0
      %v668 = vmax.f32 %v519, 0.0
      %v669 = vmax.f32 %v523, 0.0
      %v670 = vmax.f32 %v525, 0.0
      %v671 = vmax.f32 %v527, 0.0
      %v672 = vmax.f32 %v529, 0.0
      %v673 = vmax.f32 %v533, 0.0
      %v674 = vmax.f32 %v535, 0.0
      %v675 = vmax.f32 %v537, 0.0
      %v676 = vmax.f32 %v539, 0.0
      %v677 = vmax.f32 %v543, 0.0
      %v678 = vmax.f32 %v545, 0.0
      %v679 = vmax.f32 %v547, 0.0
      %v680 = vmax.f32 %v549, 0.0
      %v681 = vmax.f32 %v553, 0.0
      %v682 = vmax.f32 %v555, 0.0
      %v683 = vmax.f32 %v557, 0.0
      %v684 = vmax.f32 %v559, 0.0
      %v685 = vmax.f32 %v563, 0.0
      %v686 = vmax.f32 %v565, 0.0
      %v687 = vmax.f32 %v567, 0.0
      %v688 = vmax.f32 %v569, 0.0
      %v689 = vmax.f32 %v573, 0.0
      %v690 = vmax.f32 %v575, 0.0
      %v691 = vmax.f32 %v577, 0.0
      %v692 = vmax.f32 %v579, 0.0
      %v693 = vmax.f32 %v583, 0.0
      %v694 = vmax.f32 %v585, 0.0
      %v695 = vmax.f32 %v587, 0.0
      %v696 = vmax.f32 %v589, 0.0
      %v697 = vmax.f32 %v593, 0.0
      %v698 = vmax.f32 %v595, 0.0
      %v699 = vmax.f32 %v597, 0.0
      %v700 = vmax.f32 %v599, 0.0
      %v701 = vmax.f32 %v603, 0.0
      %v702 = vmax.f32 %v605, 0.0
      %v703 = vmax.f32 %v607, 0.0
      %v704 = vmax.f32 %v609, 0.0
      %v705 = vmax.f32 %v613, 0.0
      %v706 = vmax.f32 %v615, 0.0
      %v707 = vmax.f32 %v617, 0.0
      %v708 = vmax.f32 %v619, 0.0
      %v709 = vmax.f32 %v623, 0.0
      %v710 = vmax.f32 %v625, 0.0
      %v711 = vmax.f32 %v627, 0.0
      %v712 = vmax.f32 %v629, 0.0
      %v713 = vmax.f32 %v633, 0.0
      %v714 = vmax.f32 %v635, 0.0
      %v715 = vmax.f32 %v637, 0.0
      %v716 = vmax.f32 %v639, 0.0
      %v717 = vmax.f32 %v643, 0.0
      %v718 = vmax.f32 %v645, 0.0
      %v719 = vmax.f32 %v647, 0.0
      %v720 = vmax.f32 %v649, 0.0
      %v721 = vmax.f32 %v653, 0.0
      %v722 = vmax.f32 %v655, 0.0
      %v723 = vmax.f32 %v657, 0.0
      %v724 = vmax.f32 %v659, 0.0
      %v725 = vpack.c.bf16 %v663, %v661
      %v726 = vpack.c.bf16 %v664, %v662
      %v727 = vpack.c.bf16 %v667, %v665
      %v728 = vpack.c.bf16 %v668, %v666
      %v729 = vpack.c.bf16 %v671, %v669
      %v730 = vpack.c.bf16 %v672, %v670
      %v731 = vpack.c.bf16 %v675, %v673
      %v732 = vpack.c.bf16 %v676, %v674
      %v733 = vpack.c.bf16 %v679, %v677
      %v734 = vpack.c.bf16 %v680, %v678
      %v735 = vpack.c.bf16 %v683, %v681
      %v736 = vpack.c.bf16 %v684, %v682
      %v737 = vpack.c.bf16 %v687, %v685
      %v738 = vpack.c.bf16 %v688, %v686
      %v739 = vpack.c.bf16 %v691, %v689
      %v740 = vpack.c.bf16 %v692, %v690
      %v741 = vpack.c.bf16 %v695, %v693
      %v742 = vpack.c.bf16 %v696, %v694
      %v743 = vpack.c.bf16 %v699, %v697
      %v744 = vpack.c.bf16 %v700, %v698
      %v745 = vpack.c.bf16 %v703, %v701
      %v746 = vpack.c.bf16 %v704, %v702
      %v747 = vpack.c.bf16 %v707, %v705
      %v748 = vpack.c.bf16 %v708, %v706
      %v749 = vpack.c.bf16 %v711, %v709
      %v750 = vpack.c.bf16 %v712, %v710
      %v751 = vpack.c.bf16 %v715, %v713
      %v752 = vpack.c.bf16 %v716, %v714
      %v753 = vpack.c.bf16 %v719, %v717
      %v754 = vpack.c.bf16 %v720, %v718
      %v755 = vpack.c.bf16 %v723, %v721
      %v756 = vpack.c.bf16 %v724, %v722
      %v757 = vld [vmem:[%s3] sm:$0xff]
      %v758 = vld [vmem:[%s3 + $0x8] sm:$0xff]
      %v759 = vld [vmem:[%s3 + $0x10] sm:$0xff]
      %v760 = vld [vmem:[%s3 + $0x18] sm:$0xff]
      %v761 = vld [vmem:[%s3 + $0x20] sm:$0xff]
      %v762 = vld [vmem:[%s3 + $0x28] sm:$0xff]
      %v763 = vld [vmem:[%s3 + $0x30] sm:$0xff]
      %v764 = vld [vmem:[%s3 + $0x38] sm:$0xff]
      %v765 = vld [vmem:[%s3 + $0x40] sm:$0xff]
      %v766 = vld [vmem:[%s3 + $0x48] sm:$0xff]
      %v767 = vld [vmem:[%s3 + $0x50] sm:$0xff]
      %v768 = vld [vmem:[%s3 + $0x58] sm:$0xff]
      %v769 = vld [vmem:[%s3 + $0x60] sm:$0xff]
      %v770 = vld [vmem:[%s3 + $0x68] sm:$0xff]
      %v771 = vld [vmem:[%s3 + $0x70] sm:$0xff]
      %v772 = vld [vmem:[%s3 + $0x78] sm:$0xff]
      %v773 = vld [vmem:[%s3 + $0x80] sm:$0xff]
      %v774 = vld [vmem:[%s3 + $0x88] sm:$0xff]
      %v775 = vld [vmem:[%s3 + $0x90] sm:$0xff]
      %v776 = vld [vmem:[%s3 + $0x98] sm:$0xff]
      %v777 = vld [vmem:[%s3 + $0xa0] sm:$0xff]
      %v778 = vld [vmem:[%s3 + $0xa8] sm:$0xff]
      %v779 = vld [vmem:[%s3 + $0xb0] sm:$0xff]
      %v780 = vld [vmem:[%s3 + $0xb8] sm:$0xff]
      %v781 = vld [vmem:[%s3 + $0xc0] sm:$0xff]
      %v782 = vld [vmem:[%s3 + $0xc8] sm:$0xff]
      %v783 = vld [vmem:[%s3 + $0xd0] sm:$0xff]
      %v784 = vld [vmem:[%s3 + $0xd8] sm:$0xff]
      %v785 = vld [vmem:[%s3 + $0xe0] sm:$0xff]
      %v786 = vld [vmem:[%s3 + $0xe8] sm:$0xff]
      %v787 = vld [vmem:[%s3 + $0xf0] sm:$0xff]
      %v788 = vld [vmem:[%s3 + $0xf8] sm:$0xff]
      %v789 = vld [vmem:[%s4] sm:$0x3]
      %v791 = vlaneseq
      %v792 = vshrl.u32 %v791, 7
      %v793 = vsub.s32 0, %v792
      %v794 = vrot.slane %v789, %v793
      %v795 = vlaneseq
      %v796 = vshrl.u32 %v795, 7
      %v797 = vsub.s32 1, %v796
      %v798 = vrot.slane %v789, %v797
      %v833 = vunpack.c.l.b16 %v757
      %v834 = vunpack.c.h.b16 %v757
      %v835 = vunpack.c.l.b16 %v758
      %v836 = vunpack.c.h.b16 %v758
      %v837 = vunpack.c.l.b16 %v759
      %v838 = vunpack.c.h.b16 %v759
      %v839 = vunpack.c.l.b16 %v760
      %v840 = vunpack.c.h.b16 %v760
      %v841 = vunpack.c.l.b16 %v761
      %v842 = vunpack.c.h.b16 %v761
      %v843 = vunpack.c.l.b16 %v762
      %v844 = vunpack.c.h.b16 %v762
      %v845 = vunpack.c.l.b16 %v763
      %v846 = vunpack.c.h.b16 %v763
      %v847 = vunpack.c.l.b16 %v764
      %v848 = vunpack.c.h.b16 %v764
      %v849 = vunpack.c.l.b16 %v765
      %v850 = vunpack.c.h.b16 %v765
      %v851 = vunpack.c.l.b16 %v766
      %v852 = vunpack.c.h.b16 %v766
      %v853 = vunpack.c.l.b16 %v767
      %v854 = vunpack.c.h.b16 %v767
      %v855 = vunpack.c.l.b16 %v768
      %v856 = vunpack.c.h.b16 %v768
      %v857 = vunpack.c.l.b16 %v769
      %v858 = vunpack.c.h.b16 %v769
      %v859 = vunpack.c.l.b16 %v770
      %v860 = vunpack.c.h.b16 %v770
      %v861 = vunpack.c.l.b16 %v771
      %v862 = vunpack.c.h.b16 %v771
      %v863 = vunpack.c.l.b16 %v772
      %v864 = vunpack.c.h.b16 %v772
      %v865 = vunpack.c.l.b16 %v773
      %v866 = vunpack.c.h.b16 %v773
      %v867 = vunpack.c.l.b16 %v774
      %v868 = vunpack.c.h.b16 %v774
      %v869 = vunpack.c.l.b16 %v775
      %v870 = vunpack.c.h.b16 %v775
      %v871 = vunpack.c.l.b16 %v776
      %v872 = vunpack.c.h.b16 %v776
      %v873 = vunpack.c.l.b16 %v777
      %v874 = vunpack.c.h.b16 %v777
      %v875 = vunpack.c.l.b16 %v778
      %v876 = vunpack.c.h.b16 %v778
      %v877 = vunpack.c.l.b16 %v779
      %v878 = vunpack.c.h.b16 %v779
      %v879 = vunpack.c.l.b16 %v780
      %v880 = vunpack.c.h.b16 %v780
      %v881 = vunpack.c.l.b16 %v781
      %v882 = vunpack.c.h.b16 %v781
      %v883 = vunpack.c.l.b16 %v782
      %v884 = vunpack.c.h.b16 %v782
      %v885 = vunpack.c.l.b16 %v783
      %v886 = vunpack.c.h.b16 %v783
      %v887 = vunpack.c.l.b16 %v784
      %v888 = vunpack.c.h.b16 %v784
      %v889 = vunpack.c.l.b16 %v785
      %v890 = vunpack.c.h.b16 %v785
      %v891 = vunpack.c.l.b16 %v786
      %v892 = vunpack.c.h.b16 %v786
      %v893 = vunpack.c.l.b16 %v787
      %v894 = vunpack.c.h.b16 %v787
      %v895 = vunpack.c.l.b16 %v788
      %v896 = vunpack.c.h.b16 %v788
      %v897 = vpack.c.b16 %v835, %v833
      %v898 = vpack.c.b16 %v836, %v834
      %v899 = vpack.c.b16 %v839, %v837
      %v900 = vpack.c.b16 %v840, %v838
      %v901 = vpack.c.b16 %v843, %v841
      %v902 = vpack.c.b16 %v844, %v842
      %v903 = vpack.c.b16 %v847, %v845
      %v904 = vpack.c.b16 %v848, %v846
      %v905 = vpack.c.b16 %v851, %v849
      %v906 = vpack.c.b16 %v852, %v850
      %v907 = vpack.c.b16 %v855, %v853
      %v908 = vpack.c.b16 %v856, %v854
      %v909 = vpack.c.b16 %v859, %v857
      %v910 = vpack.c.b16 %v860, %v858
      %v911 = vpack.c.b16 %v863, %v861
      %v912 = vpack.c.b16 %v864, %v862
      %v913 = vpack.c.b16 %v867, %v865
      %v914 = vpack.c.b16 %v868, %v866
      %v915 = vpack.c.b16 %v871, %v869
      %v916 = vpack.c.b16 %v872, %v870
      %v917 = vpack.c.b16 %v875, %v873
      %v918 = vpack.c.b16 %v876, %v874
      %v919 = vpack.c.b16 %v879, %v877
      %v920 = vpack.c.b16 %v880, %v878
      %v921 = vpack.c.b16 %v883, %v881
      %v922 = vpack.c.b16 %v884, %v882
      %v923 = vpack.c.b16 %v887, %v885
      %v924 = vpack.c.b16 %v888, %v886
      %v925 = vpack.c.b16 %v891, %v889
      %v926 = vpack.c.b16 %v892, %v890
      %v927 = vpack.c.b16 %v895, %v893
      %v928 = vpack.c.b16 %v896, %v894
      %961 = vmatprep.subr.bf16.mxu0 %v898
      %962 = vmatpush1.bf16.msra.mxu0 %v897
      %963 = vmatprep.subr.bf16.mxu0 %v900
      %964 = vmatpush1.bf16.msra.mxu0 %v899
      %965 = vmatprep.subr.bf16.mxu0 %v902
      %966 = vmatpush1.bf16.msra.mxu0 %v901
      %967 = vmatprep.subr.bf16.mxu0 %v904
      %968 = vmatpush1.bf16.msra.mxu0 %v903
      %969 = vmatprep.subr.bf16.mxu0 %v906
      %970 = vmatpush1.bf16.msra.mxu0 %v905
      %971 = vmatprep.subr.bf16.mxu0 %v908
      %972 = vmatpush1.bf16.msra.mxu0 %v907
      %973 = vmatprep.subr.bf16.mxu0 %v910
      %974 = vmatpush1.bf16.msra.mxu0 %v909
      %975 = vmatprep.subr.bf16.mxu0 %v912
      %976 = vmatpush1.bf16.msra.mxu0 %v911
      %977 = vmatprep.subr.bf16.mxu0 %v914
      %978 = vmatpush1.bf16.msra.mxu0 %v913
      %979 = vmatprep.subr.bf16.mxu0 %v916
      %980 = vmatpush1.bf16.msra.mxu0 %v915
      %981 = vmatprep.subr.bf16.mxu0 %v918
      %982 = vmatpush1.bf16.msra.mxu0 %v917
      %983 = vmatprep.subr.bf16.mxu0 %v920
      %984 = vmatpush1.bf16.msra.mxu0 %v919
      %985 = vmatprep.subr.bf16.mxu0 %v922
      %986 = vmatpush1.bf16.msra.mxu0 %v921
      %987 = vmatprep.subr.bf16.mxu0 %v924
      %988 = vmatpush1.bf16.msra.mxu0 %v923
      %989 = vmatprep.subr.bf16.mxu0 %v926
      %990 = vmatpush1.bf16.msra.mxu0 %v925
      %991 = vmatprep.subr.bf16.mxu0 %v928
      %992 = vmatpush1.bf16.msra.mxu0 %v927
      %993 = vmatprep.mubr.bf16.mxu0 %v726
      %994 = vmatmul.mubr.bf16.gmra.mrb[0].mxu0 %v725
      %v995 = vpop.f32.mrb[0].mxu0
      %v996 = vadd.f32 %v794, %v995
      %v997 = vpop.f32.mrb[0].mxu0
      %v998 = vadd.f32 %v798, %v997
      %v999 = vpop.f32.mrb[0].mxu0
      %v1000 = vadd.f32 %v794, %v999
      %v1001 = vpop.f32.mrb[0].mxu0
      %v1002 = vadd.f32 %v798, %v1001
      %1003 = vmatprep.mubr.bf16.mxu0 %v728
      %1004 = vmatmul.mubr.bf16.gmra.mrb[0].mxu0 %v727
      %v1005 = vpop.f32.mrb[0].mxu0
      %v1006 = vadd.f32 %v794, %v1005
      %v1007 = vpop.f32.mrb[0].mxu0
      %v1008 = vadd.f32 %v798, %v1007
      %v1009 = vpop.f32.mrb[0].mxu0
      %v1010 = vadd.f32 %v794, %v1009
      %v1011 = vpop.f32.mrb[0].mxu0
      %v1012 = vadd.f32 %v798, %v1011
      %1013 = vmatprep.mubr.bf16.mxu0 %v730
      %1014 = vmatmul.mubr.bf16.gmra.mrb[0].mxu0 %v729
      %v1015 = vpop.f32.mrb[0].mxu0
      %v1016 = vadd.f32 %v794, %v1015
      %v1017 = vpop.f32.mrb[0].mxu0
      %v1018 = vadd.f32 %v798, %v1017
      %v1019 = vpop.f32.mrb[0].mxu0
      %v1020 = vadd.f32 %v794, %v1019
      %v1021 = vpop.f32.mrb[0].mxu0
      %v1022 = vadd.f32 %v798, %v1021
      %1023 = vmatprep.mubr.bf16.mxu0 %v732
      %1024 = vmatmul.mubr.bf16.gmra.mrb[0].mxu0 %v731
      %v1025 = vpop.f32.mrb[0].mxu0
      %v1026 = vadd.f32 %v794, %v1025
      %v1027 = vpop.f32.mrb[0].mxu0
      %v1028 = vadd.f32 %v798, %v1027
      %v1029 = vpop.f32.mrb[0].mxu0
      %v1030 = vadd.f32 %v794, %v1029
      %v1031 = vpop.f32.mrb[0].mxu0
      %v1032 = vadd.f32 %v798, %v1031
      %1033 = vmatprep.mubr.bf16.mxu0 %v734
      %1034 = vmatmul.mubr.bf16.gmra.mrb[0].mxu0 %v733
      %v1035 = vpop.f32.mrb[0].mxu0
      %v1036 = vadd.f32 %v794, %v1035
      %v1037 = vpop.f32.mrb[0].mxu0
      %v1038 = vadd.f32 %v798, %v1037
      %v1039 = vpop.f32.mrb[0].mxu0
      %v1040 = vadd.f32 %v794, %v1039
      %v1041 = vpop.f32.mrb[0].mxu0
      %v1042 = vadd.f32 %v798, %v1041
      %1043 = vmatprep.mubr.bf16.mxu0 %v736
      %1044 = vmatmul.mubr.bf16.gmra.mrb[0].mxu0 %v735
      %v1045 = vpop.f32.mrb[0].mxu0
      %v1046 = vadd.f32 %v794, %v1045
      %v1047 = vpop.f32.mrb[0].mxu0
      %v1048 = vadd.f32 %v798, %v1047
      %v1049 = vpop.f32.mrb[0].mxu0
      %v1050 = vadd.f32 %v794, %v1049
      %v1051 = vpop.f32.mrb[0].mxu0
      %v1052 = vadd.f32 %v798, %v1051
      %1053 = vmatprep.mubr.bf16.mxu0 %v738
      %1054 = vmatmul.mubr.bf16.gmra.mrb[0].mxu0 %v737
      %v1055 = vpop.f32.mrb[0].mxu0
      %v1056 = vadd.f32 %v794, %v1055
      %v1057 = vpop.f32.mrb[0].mxu0
      %v1058 = vadd.f32 %v798, %v1057
      %v1059 = vpop.f32.mrb[0].mxu0
      %v1060 = vadd.f32 %v794, %v1059
      %v1061 = vpop.f32.mrb[0].mxu0
      %v1062 = vadd.f32 %v798, %v1061
      %1063 = vmatprep.mubr.bf16.mxu0 %v740
      %1064 = vmatmul.mubr.bf16.gmra.mrb[0].mxu0 %v739
      %v1065 = vpop.f32.mrb[0].mxu0
      %v1066 = vadd.f32 %v794, %v1065
      %v1067 = vpop.f32.mrb[0].mxu0
      %v1068 = vadd.f32 %v798, %v1067
      %v1069 = vpop.f32.mrb[0].mxu0
      %v1070 = vadd.f32 %v794, %v1069
      %v1071 = vpop.f32.mrb[0].mxu0
      %v1072 = vadd.f32 %v798, %v1071
      %1073 = vmatprep.mubr.bf16.mxu0 %v742
      %1074 = vmatmul.mubr.bf16.gmra.mrb[0].mxu0 %v741
      %v1075 = vpop.f32.mrb[0].mxu0
      %v1076 = vadd.f32 %v794, %v1075
      %v1077 = vpop.f32.mrb[0].mxu0
      %v1078 = vadd.f32 %v798, %v1077
      %v1079 = vpop.f32.mrb[0].mxu0
      %v1080 = vadd.f32 %v794, %v1079
      %v1081 = vpop.f32.mrb[0].mxu0
      %v1082 = vadd.f32 %v798, %v1081
      %1083 = vmatprep.mubr.bf16.mxu0 %v744
      %1084 = vmatmul.mubr.bf16.gmra.mrb[0].mxu0 %v743
      %v1085 = vpop.f32.mrb[0].mxu0
      %v1086 = vadd.f32 %v794, %v1085
      %v1087 = vpop.f32.mrb[0].mxu0
      %v1088 = vadd.f32 %v798, %v1087
      %v1089 = vpop.f32.mrb[0].mxu0
      %v1090 = vadd.f32 %v794, %v1089
      %v1091 = vpop.f32.mrb[0].mxu0
      %v1092 = vadd.f32 %v798, %v1091
      %1093 = vmatprep.mubr.bf16.mxu0 %v746
      %1094 = vmatmul.mubr.bf16.gmra.mrb[0].mxu0 %v745
      %v1095 = vpop.f32.mrb[0].mxu0
      %v1096 = vadd.f32 %v794, %v1095
      %v1097 = vpop.f32.mrb[0].mxu0
      %v1098 = vadd.f32 %v798, %v1097
      %v1099 = vpop.f32.mrb[0].mxu0
      %v1100 = vadd.f32 %v794, %v1099
      %v1101 = vpop.f32.mrb[0].mxu0
      %v1102 = vadd.f32 %v798, %v1101
      %1103 = vmatprep.mubr.bf16.mxu0 %v748
      %1104 = vmatmul.mubr.bf16.gmra.mrb[0].mxu0 %v747
      %v1105 = vpop.f32.mrb[0].mxu0
      %v1106 = vadd.f32 %v794, %v1105
      %v1107 = vpop.f32.mrb[0].mxu0
      %v1108 = vadd.f32 %v798, %v1107
      %v1109 = vpop.f32.mrb[0].mxu0
      %v1110 = vadd.f32 %v794, %v1109
      %v1111 = vpop.f32.mrb[0].mxu0
      %v1112 = vadd.f32 %v798, %v1111
      %1113 = vmatprep.mubr.bf16.mxu0 %v750
      %1114 = vmatmul.mubr.bf16.gmra.mrb[0].mxu0 %v749
      %v1115 = vpop.f32.mrb[0].mxu0
      %v1116 = vadd.f32 %v794, %v1115
      %v1117 = vpop.f32.mrb[0].mxu0
      %v1118 = vadd.f32 %v798, %v1117
      %v1119 = vpop.f32.mrb[0].mxu0
      %v1120 = vadd.f32 %v794, %v1119
      %v1121 = vpop.f32.mrb[0].mxu0
      %v1122 = vadd.f32 %v798, %v1121
      %1123 = vmatprep.mubr.bf16.mxu0 %v752
      %1124 = vmatmul.mubr.bf16.gmra.mrb[0].mxu0 %v751
      %v1125 = vpop.f32.mrb[0].mxu0
      %v1126 = vadd.f32 %v794, %v1125
      %v1127 = vpop.f32.mrb[0].mxu0
      %v1128 = vadd.f32 %v798, %v1127
      %v1129 = vpop.f32.mrb[0].mxu0
      %v1130 = vadd.f32 %v794, %v1129
      %v1131 = vpop.f32.mrb[0].mxu0
      %v1132 = vadd.f32 %v798, %v1131
      %1133 = vmatprep.mubr.bf16.mxu0 %v754
      %1134 = vmatmul.mubr.bf16.gmra.mrb[0].mxu0 %v753
      %v1135 = vpop.f32.mrb[0].mxu0
      %v1136 = vadd.f32 %v794, %v1135
      %v1137 = vpop.f32.mrb[0].mxu0
      %v1138 = vadd.f32 %v798, %v1137
      %v1139 = vpop.f32.mrb[0].mxu0
      %v1140 = vadd.f32 %v794, %v1139
      %v1141 = vpop.f32.mrb[0].mxu0
      %v1142 = vadd.f32 %v798, %v1141
      %1143 = vmatprep.mubr.bf16.mxu0 %v756
      %1144 = vmatmul.mubr.bf16.gmra.mrb[0].mxu0 %v755
      %v1145 = vpop.f32.mrb[0].mxu0
      %v1146 = vadd.f32 %v794, %v1145
      %v1147 = vpop.f32.mrb[0].mxu0
      %v1148 = vadd.f32 %v798, %v1147
      %v1149 = vpop.f32.mrb[0].mxu0
      %v1150 = vadd.f32 %v794, %v1149
      %v1151 = vpop.f32.mrb[0].mxu0
      %v1152 = vadd.f32 %v798, %v1151
      %1153 = vdwg.mxu0
      %v1154 = vmax.f32 %v996, 0.0
      %v1155 = vmax.f32 %v998, 0.0
      %v1156 = vmax.f32 %v1000, 0.0
      %v1157 = vmax.f32 %v1002, 0.0
      %v1158 = vmax.f32 %v1006, 0.0
      %v1159 = vmax.f32 %v1008, 0.0
      %v1160 = vmax.f32 %v1010, 0.0
      %v1161 = vmax.f32 %v1012, 0.0
      %v1162 = vmax.f32 %v1016, 0.0
      %v1163 = vmax.f32 %v1018, 0.0
      %v1164 = vmax.f32 %v1020, 0.0
      %v1165 = vmax.f32 %v1022, 0.0
      %v1166 = vmax.f32 %v1026, 0.0
      %v1167 = vmax.f32 %v1028, 0.0
      %v1168 = vmax.f32 %v1030, 0.0
      %v1169 = vmax.f32 %v1032, 0.0
      %v1170 = vmax.f32 %v1036, 0.0
      %v1171 = vmax.f32 %v1038, 0.0
      %v1172 = vmax.f32 %v1040, 0.0
      %v1173 = vmax.f32 %v1042, 0.0
      %v1174 = vmax.f32 %v1046, 0.0
      %v1175 = vmax.f32 %v1048, 0.0
      %v1176 = vmax.f32 %v1050, 0.0
      %v1177 = vmax.f32 %v1052, 0.0
      %v1178 = vmax.f32 %v1056, 0.0
      %v1179 = vmax.f32 %v1058, 0.0
      %v1180 = vmax.f32 %v1060, 0.0
      %v1181 = vmax.f32 %v1062, 0.0
      %v1182 = vmax.f32 %v1066, 0.0
      %v1183 = vmax.f32 %v1068, 0.0
      %v1184 = vmax.f32 %v1070, 0.0
      %v1185 = vmax.f32 %v1072, 0.0
      %v1186 = vmax.f32 %v1076, 0.0
      %v1187 = vmax.f32 %v1078, 0.0
      %v1188 = vmax.f32 %v1080, 0.0
      %v1189 = vmax.f32 %v1082, 0.0
      %v1190 = vmax.f32 %v1086, 0.0
      %v1191 = vmax.f32 %v1088, 0.0
      %v1192 = vmax.f32 %v1090, 0.0
      %v1193 = vmax.f32 %v1092, 0.0
      %v1194 = vmax.f32 %v1096, 0.0
      %v1195 = vmax.f32 %v1098, 0.0
      %v1196 = vmax.f32 %v1100, 0.0
      %v1197 = vmax.f32 %v1102, 0.0
      %v1198 = vmax.f32 %v1106, 0.0
      %v1199 = vmax.f32 %v1108, 0.0
      %v1200 = vmax.f32 %v1110, 0.0
      %v1201 = vmax.f32 %v1112, 0.0
      %v1202 = vmax.f32 %v1116, 0.0
      %v1203 = vmax.f32 %v1118, 0.0
      %v1204 = vmax.f32 %v1120, 0.0
      %v1205 = vmax.f32 %v1122, 0.0
      %v1206 = vmax.f32 %v1126, 0.0
      %v1207 = vmax.f32 %v1128, 0.0
      %v1208 = vmax.f32 %v1130, 0.0
      %v1209 = vmax.f32 %v1132, 0.0
      %v1210 = vmax.f32 %v1136, 0.0
      %v1211 = vmax.f32 %v1138, 0.0
      %v1212 = vmax.f32 %v1140, 0.0
      %v1213 = vmax.f32 %v1142, 0.0
      %v1214 = vmax.f32 %v1146, 0.0
      %v1215 = vmax.f32 %v1148, 0.0
      %v1216 = vmax.f32 %v1150, 0.0
      %v1217 = vmax.f32 %v1152, 0.0
      %v1218 = vpack.c.bf16 %v1156, %v1154
      %v1219 = vpack.c.bf16 %v1157, %v1155
      %v1220 = vpack.c.bf16 %v1160, %v1158
      %v1221 = vpack.c.bf16 %v1161, %v1159
      %v1222 = vpack.c.bf16 %v1164, %v1162
      %v1223 = vpack.c.bf16 %v1165, %v1163
      %v1224 = vpack.c.bf16 %v1168, %v1166
      %v1225 = vpack.c.bf16 %v1169, %v1167
      %v1226 = vpack.c.bf16 %v1172, %v1170
      %v1227 = vpack.c.bf16 %v1173, %v1171
      %v1228 = vpack.c.bf16 %v1176, %v1174
      %v1229 = vpack.c.bf16 %v1177, %v1175
      %v1230 = vpack.c.bf16 %v1180, %v1178
      %v1231 = vpack.c.bf16 %v1181, %v1179
      %v1232 = vpack.c.bf16 %v1184, %v1182
      %v1233 = vpack.c.bf16 %v1185, %v1183
      %v1234 = vpack.c.bf16 %v1188, %v1186
      %v1235 = vpack.c.bf16 %v1189, %v1187
      %v1236 = vpack.c.bf16 %v1192, %v1190
      %v1237 = vpack.c.bf16 %v1193, %v1191
      %v1238 = vpack.c.bf16 %v1196, %v1194
      %v1239 = vpack.c.bf16 %v1197, %v1195
      %v1240 = vpack.c.bf16 %v1200, %v1198
      %v1241 = vpack.c.bf16 %v1201, %v1199
      %v1242 = vpack.c.bf16 %v1204, %v1202
      %v1243 = vpack.c.bf16 %v1205, %v1203
      %v1244 = vpack.c.bf16 %v1208, %v1206
      %v1245 = vpack.c.bf16 %v1209, %v1207
      %v1246 = vpack.c.bf16 %v1212, %v1210
      %v1247 = vpack.c.bf16 %v1213, %v1211
      %v1248 = vpack.c.bf16 %v1216, %v1214
      %v1249 = vpack.c.bf16 %v1217, %v1215
      %v1250 = vld [vmem:[%s5] sm:$0xf]
      %v1251 = vld [vmem:[%s5 + $0x4] sm:$0xf]
      %v1252 = vld [vmem:[%s5 + $0x8] sm:$0xf]
      %v1253 = vld [vmem:[%s5 + $0xc] sm:$0xf]
      %v1254 = vld [vmem:[%s5 + $0x10] sm:$0xf]
      %v1255 = vld [vmem:[%s5 + $0x14] sm:$0xf]
      %v1256 = vld [vmem:[%s5 + $0x18] sm:$0xf]
      %v1257 = vld [vmem:[%s5 + $0x1c] sm:$0xf]
      %v1258 = vld [vmem:[%s5 + $0x20] sm:$0xf]
      %v1259 = vld [vmem:[%s5 + $0x24] sm:$0xf]
      %v1260 = vld [vmem:[%s5 + $0x28] sm:$0xf]
      %v1261 = vld [vmem:[%s5 + $0x2c] sm:$0xf]
      %v1262 = vld [vmem:[%s5 + $0x30] sm:$0xf]
      %v1263 = vld [vmem:[%s5 + $0x34] sm:$0xf]
      %v1264 = vld [vmem:[%s5 + $0x38] sm:$0xf]
      %v1265 = vld [vmem:[%s5 + $0x3c] sm:$0xf]
      %v1266 = vld [vmem:[%s5 + $0x40] sm:$0xf]
      %v1267 = vld [vmem:[%s5 + $0x44] sm:$0xf]
      %v1268 = vld [vmem:[%s5 + $0x48] sm:$0xf]
      %v1269 = vld [vmem:[%s5 + $0x4c] sm:$0xf]
      %v1270 = vld [vmem:[%s5 + $0x50] sm:$0xf]
      %v1271 = vld [vmem:[%s5 + $0x54] sm:$0xf]
      %v1272 = vld [vmem:[%s5 + $0x58] sm:$0xf]
      %v1273 = vld [vmem:[%s5 + $0x5c] sm:$0xf]
      %v1274 = vld [vmem:[%s5 + $0x60] sm:$0xf]
      %v1275 = vld [vmem:[%s5 + $0x64] sm:$0xf]
      %v1276 = vld [vmem:[%s5 + $0x68] sm:$0xf]
      %v1277 = vld [vmem:[%s5 + $0x6c] sm:$0xf]
      %v1278 = vld [vmem:[%s5 + $0x70] sm:$0xf]
      %v1279 = vld [vmem:[%s5 + $0x74] sm:$0xf]
      %v1280 = vld [vmem:[%s5 + $0x78] sm:$0xf]
      %v1281 = vld [vmem:[%s5 + $0x7c] sm:$0xf]
      %v1282 = vld [vmem:[%s6] sm:$0x1]
      %v1284 = vlaneseq
      %v1285 = vshrl.u32 %v1284, 7
      %v1286 = vsub.s32 0, %v1285
      %v1287 = vrot.slane %v1282, %v1286
      %v1321 = vunpack.c.l.b16 %v1250
      %v1322 = vunpack.c.l.b16 %v1251
      %v1323 = vunpack.c.l.b16 %v1252
      %v1324 = vunpack.c.l.b16 %v1253
      %v1325 = vunpack.c.l.b16 %v1254
      %v1326 = vunpack.c.l.b16 %v1255
      %v1327 = vunpack.c.l.b16 %v1256
      %v1328 = vunpack.c.l.b16 %v1257
      %v1329 = vunpack.c.l.b16 %v1258
      %v1330 = vunpack.c.l.b16 %v1259
      %v1331 = vunpack.c.l.b16 %v1260
      %v1332 = vunpack.c.l.b16 %v1261
      %v1333 = vunpack.c.l.b16 %v1262
      %v1334 = vunpack.c.l.b16 %v1263
      %v1335 = vunpack.c.l.b16 %v1264
      %v1336 = vunpack.c.l.b16 %v1265
      %v1337 = vunpack.c.l.b16 %v1266
      %v1338 = vunpack.c.l.b16 %v1267
      %v1339 = vunpack.c.l.b16 %v1268
      %v1340 = vunpack.c.l.b16 %v1269
      %v1341 = vunpack.c.l.b16 %v1270
      %v1342 = vunpack.c.l.b16 %v1271
      %v1343 = vunpack.c.l.b16 %v1272
      %v1344 = vunpack.c.l.b16 %v1273
      %v1345 = vunpack.c.l.b16 %v1274
      %v1346 = vunpack.c.l.b16 %v1275
      %v1347 = vunpack.c.l.b16 %v1276
      %v1348 = vunpack.c.l.b16 %v1277
      %v1349 = vunpack.c.l.b16 %v1278
      %v1350 = vunpack.c.l.b16 %v1279
      %v1351 = vunpack.c.l.b16 %v1280
      %v1352 = vunpack.c.l.b16 %v1281
      %v1353 = vpack.c.b16 %v1322, %v1321
      %v1354 = vpack.c.b16 %v1324, %v1323
      %v1355 = vpack.c.b16 %v1326, %v1325
      %v1356 = vpack.c.b16 %v1328, %v1327
      %v1357 = vpack.c.b16 %v1330, %v1329
      %v1358 = vpack.c.b16 %v1332, %v1331
      %v1359 = vpack.c.b16 %v1334, %v1333
      %v1360 = vpack.c.b16 %v1336, %v1335
      %v1361 = vpack.c.b16 %v1338, %v1337
      %v1362 = vpack.c.b16 %v1340, %v1339
      %v1363 = vpack.c.b16 %v1342, %v1341
      %v1364 = vpack.c.b16 %v1344, %v1343
      %v1365 = vpack.c.b16 %v1346, %v1345
      %v1366 = vpack.c.b16 %v1348, %v1347
      %v1367 = vpack.c.b16 %v1350, %v1349
      %v1368 = vpack.c.b16 %v1352, %v1351
      %1385 = vmatprep.subr.bf16.mxu0 0
      %1386 = vmatpush1.bf16.msra.mxu0 %v1353
      %1387 = vmatprep.subr.bf16.mxu0 0
      %1388 = vmatpush1.bf16.msra.mxu0 %v1354
      %1389 = vmatprep.subr.bf16.mxu0 0
      %1390 = vmatpush1.bf16.msra.mxu0 %v1355
      %1391 = vmatprep.subr.bf16.mxu0 0
      %1392 = vmatpush1.bf16.msra.mxu0 %v1356
      %1393 = vmatprep.subr.bf16.mxu0 0
      %1394 = vmatpush1.bf16.msra.mxu0 %v1357
      %1395 = vmatprep.subr.bf16.mxu0 0
      %1396 = vmatpush1.bf16.msra.mxu0 %v1358
      %1397 = vmatprep.subr.bf16.mxu0 0
      %1398 = vmatpush1.bf16.msra.mxu0 %v1359
      %1399 = vmatprep.subr.bf16.mxu0 0
      %1400 = vmatpush1.bf16.msra.mxu0 %v1360
      %1401 = vmatprep.subr.bf16.mxu0 0
      %1402 = vmatpush1.bf16.msra.mxu0 %v1361
      %1403 = vmatprep.subr.bf16.mxu0 0
      %1404 = vmatpush1.bf16.msra.mxu0 %v1362
      %1405 = vmatprep.subr.bf16.mxu0 0
      %1406 = vmatpush1.bf16.msra.mxu0 %v1363
      %1407 = vmatprep.subr.bf16.mxu0 0
      %1408 = vmatpush1.bf16.msra.mxu0 %v1364
      %1409 = vmatprep.subr.bf16.mxu0 0
      %1410 = vmatpush1.bf16.msra.mxu0 %v1365
      %1411 = vmatprep.subr.bf16.mxu0 0
      %1412 = vmatpush1.bf16.msra.mxu0 %v1366
      %1413 = vmatprep.subr.bf16.mxu0 0
      %1414 = vmatpush1.bf16.msra.mxu0 %v1367
      %1415 = vmatprep.subr.bf16.mxu0 0
      %1416 = vmatpush1.bf16.msra.mxu0 %v1368
      %1417 = vmatprep.mubr.bf16.mxu0 %v1219
      %1418 = vmatmul.mubr.bf16.gmra.mrb[0].mxu0 %v1218
      %v1419 = vpop.f32.mrb[0].mxu0
      %v1420 = vadd.f32 %v1287, %v1419
      %v1421 = vpop.f32.mrb[0].mxu0
      %v1422 = vpop.f32.mrb[0].mxu0
      %v1423 = vadd.f32 %v1287, %v1422
      %v1424 = vpop.f32.mrb[0].mxu0
      %1425 = vmatprep.mubr.bf16.mxu0 %v1221
      %1426 = vmatmul.mubr.bf16.gmra.mrb[0].mxu0 %v1220
      %v1427 = vpop.f32.mrb[0].mxu0
      %v1428 = vadd.f32 %v1287, %v1427
      %v1429 = vpop.f32.mrb[0].mxu0
      %v1430 = vpop.f32.mrb[0].mxu0
      %v1431 = vadd.f32 %v1287, %v1430
      %v1432 = vpop.f32.mrb[0].mxu0
      %1433 = vmatprep.mubr.bf16.mxu0 %v1223
      %1434 = vmatmul.mubr.bf16.gmra.mrb[0].mxu0 %v1222
      %v1435 = vpop.f32.mrb[0].mxu0
      %v1436 = vadd.f32 %v1287, %v1435
      %v1437 = vpop.f32.mrb[0].mxu0
      %v1438 = vpop.f32.mrb[0].mxu0
      %v1439 = vadd.f32 %v1287, %v1438
      %v1440 = vpop.f32.mrb[0].mxu0
      %1441 = vmatprep.mubr.bf16.mxu0 %v1225
      %1442 = vmatmul.mubr.bf16.gmra.mrb[0].mxu0 %v1224
      %v1443 = vpop.f32.mrb[0].mxu0
      %v1444 = vadd.f32 %v1287, %v1443
      %v1445 = vpop.f32.mrb[0].mxu0
      %v1446 = vpop.f32.mrb[0].mxu0
      %v1447 = vadd.f32 %v1287, %v1446
      %v1448 = vpop.f32.mrb[0].mxu0
      %1449 = vmatprep.mubr.bf16.mxu0 %v1227
      %1450 = vmatmul.mubr.bf16.gmra.mrb[0].mxu0 %v1226
      %v1451 = vpop.f32.mrb[0].mxu0
      %v1452 = vadd.f32 %v1287, %v1451
      %v1453 = vpop.f32.mrb[0].mxu0
      %v1454 = vpop.f32.mrb[0].mxu0
      %v1455 = vadd.f32 %v1287, %v1454
      %v1456 = vpop.f32.mrb[0].mxu0
      %1457 = vmatprep.mubr.bf16.mxu0 %v1229
      %1458 = vmatmul.mubr.bf16.gmra.mrb[0].mxu0 %v1228
      %v1459 = vpop.f32.mrb[0].mxu0
      %v1460 = vadd.f32 %v1287, %v1459
      %v1461 = vpop.f32.mrb[0].mxu0
      %v1462 = vpop.f32.mrb[0].mxu0
      %v1463 = vadd.f32 %v1287, %v1462
      %v1464 = vpop.f32.mrb[0].mxu0
      %1465 = vmatprep.mubr.bf16.mxu0 %v1231
      %1466 = vmatmul.mubr.bf16.gmra.mrb[0].mxu0 %v1230
      %v1467 = vpop.f32.mrb[0].mxu0
      %v1468 = vadd.f32 %v1287, %v1467
      %v1469 = vpop.f32.mrb[0].mxu0
      %v1470 = vpop.f32.mrb[0].mxu0
      %v1471 = vadd.f32 %v1287, %v1470
      %v1472 = vpop.f32.mrb[0].mxu0
      %1473 = vmatprep.mubr.bf16.mxu0 %v1233
      %1474 = vmatmul.mubr.bf16.gmra.mrb[0].mxu0 %v1232
      %v1475 = vpop.f32.mrb[0].mxu0
      %v1476 = vadd.f32 %v1287, %v1475
      %v1477 = vpop.f32.mrb[0].mxu0
      %v1478 = vpop.f32.mrb[0].mxu0
      %v1479 = vadd.f32 %v1287, %v1478
      %v1480 = vpop.f32.mrb[0].mxu0
      %1481 = vmatprep.mubr.bf16.mxu0 %v1235
      %1482 = vmatmul.mubr.bf16.gmra.mrb[0].mxu0 %v1234
      %v1483 = vpop.f32.mrb[0].mxu0
      %v1484 = vadd.f32 %v1287, %v1483
      %v1485 = vpop.f32.mrb[0].mxu0
      %v1486 = vpop.f32.mrb[0].mxu0
      %v1487 = vadd.f32 %v1287, %v1486
      %v1488 = vpop.f32.mrb[0].mxu0
      %1489 = vmatprep.mubr.bf16.mxu0 %v1237
      %1490 = vmatmul.mubr.bf16.gmra.mrb[0].mxu0 %v1236
      %v1491 = vpop.f32.mrb[0].mxu0
      %v1492 = vadd.f32 %v1287, %v1491
      %v1493 = vpop.f32.mrb[0].mxu0
      %v1494 = vpop.f32.mrb[0].mxu0
      %v1495 = vadd.f32 %v1287, %v1494
      %v1496 = vpop.f32.mrb[0].mxu0
      %1497 = vmatprep.mubr.bf16.mxu0 %v1239
      %1498 = vmatmul.mubr.bf16.gmra.mrb[0].mxu0 %v1238
      %v1499 = vpop.f32.mrb[0].mxu0
      %v1500 = vadd.f32 %v1287, %v1499
      %v1501 = vpop.f32.mrb[0].mxu0
      %v1502 = vpop.f32.mrb[0].mxu0
      %v1503 = vadd.f32 %v1287, %v1502
      %v1504 = vpop.f32.mrb[0].mxu0
      %1505 = vmatprep.mubr.bf16.mxu0 %v1241
      %1506 = vmatmul.mubr.bf16.gmra.mrb[0].mxu0 %v1240
      %v1507 = vpop.f32.mrb[0].mxu0
      %v1508 = vadd.f32 %v1287, %v1507
      %v1509 = vpop.f32.mrb[0].mxu0
      %v1510 = vpop.f32.mrb[0].mxu0
      %v1511 = vadd.f32 %v1287, %v1510
      %v1512 = vpop.f32.mrb[0].mxu0
      %1513 = vmatprep.mubr.bf16.mxu0 %v1243
      %1514 = vmatmul.mubr.bf16.gmra.mrb[0].mxu0 %v1242
      %v1515 = vpop.f32.mrb[0].mxu0
      %v1516 = vadd.f32 %v1287, %v1515
      %v1517 = vpop.f32.mrb[0].mxu0
      %v1518 = vpop.f32.mrb[0].mxu0
      %v1519 = vadd.f32 %v1287, %v1518
      %v1520 = vpop.f32.mrb[0].mxu0
      %1521 = vmatprep.mubr.bf16.mxu0 %v1245
      %1522 = vmatmul.mubr.bf16.gmra.mrb[0].mxu0 %v1244
      %v1523 = vpop.f32.mrb[0].mxu0
      %v1524 = vadd.f32 %v1287, %v1523
      %v1525 = vpop.f32.mrb[0].mxu0
      %v1526 = vpop.f32.mrb[0].mxu0
      %v1527 = vadd.f32 %v1287, %v1526
      %v1528 = vpop.f32.mrb[0].mxu0
      %1529 = vmatprep.mubr.bf16.mxu0 %v1247
      %1530 = vmatmul.mubr.bf16.gmra.mrb[0].mxu0 %v1246
      %v1531 = vpop.f32.mrb[0].mxu0
      %v1532 = vadd.f32 %v1287, %v1531
      %v1533 = vpop.f32.mrb[0].mxu0
      %v1534 = vpop.f32.mrb[0].mxu0
      %v1535 = vadd.f32 %v1287, %v1534
      %v1536 = vpop.f32.mrb[0].mxu0
      %1537 = vmatprep.mubr.bf16.mxu0 %v1249
      %1538 = vmatmul.mubr.bf16.gmra.mrb[0].mxu0 %v1248
      %v1539 = vpop.f32.mrb[0].mxu0
      %v1540 = vadd.f32 %v1287, %v1539
      %v1541 = vpop.f32.mrb[0].mxu0
      %v1542 = vpop.f32.mrb[0].mxu0
      %v1543 = vadd.f32 %v1287, %v1542
      %v1544 = vpop.f32.mrb[0].mxu0
      %1545 = vdwg.mxu0
      %vm1546 = vcmask 31744
      %1547 = vst.msk [vmem:[%s280] sm:$0xff] %vm1546, %v1420
      %1548 = vst.msk [vmem:[%s280 + $0x8] sm:$0xff] %vm1546, %v1423
      %1549 = vst.msk [vmem:[%s280 + $0x10] sm:$0xff] %vm1546, %v1428
      %1550 = vst.msk [vmem:[%s280 + $0x18] sm:$0xff] %vm1546, %v1431
      %1551 = vst.msk [vmem:[%s280 + $0x20] sm:$0xff] %vm1546, %v1436
      %1552 = vst.msk [vmem:[%s280 + $0x28] sm:$0xff] %vm1546, %v1439
      %1553 = vst.msk [vmem:[%s280 + $0x30] sm:$0xff] %vm1546, %v1444
      %1554 = vst.msk [vmem:[%s280 + $0x38] sm:$0xff] %vm1546, %v1447
      %1555 = vst.msk [vmem:[%s280 + $0x40] sm:$0xff] %vm1546, %v1452
      %1556 = vst.msk [vmem:[%s280 + $0x48] sm:$0xff] %vm1546, %v1455
      %1557 = vst.msk [vmem:[%s280 + $0x50] sm:$0xff] %vm1546, %v1460
      %1558 = vst.msk [vmem:[%s280 + $0x58] sm:$0xff] %vm1546, %v1463
      %1559 = vst.msk [vmem:[%s280 + $0x60] sm:$0xff] %vm1546, %v1468
      %1560 = vst.msk [vmem:[%s280 + $0x68] sm:$0xff] %vm1546, %v1471
      %1561 = vst.msk [vmem:[%s280 + $0x70] sm:$0xff] %vm1546, %v1476
      %1562 = vst.msk [vmem:[%s280 + $0x78] sm:$0xff] %vm1546, %v1479
      %1563 = vst.msk [vmem:[%s280 + $0x80] sm:$0xff] %vm1546, %v1484
      %1564 = vst.msk [vmem:[%s280 + $0x88] sm:$0xff] %vm1546, %v1487
      %1565 = vst.msk [vmem:[%s280 + $0x90] sm:$0xff] %vm1546, %v1492
      %1566 = vst.msk [vmem:[%s280 + $0x98] sm:$0xff] %vm1546, %v1495
      %1567 = vst.msk [vmem:[%s280 + $0xa0] sm:$0xff] %vm1546, %v1500
      %1568 = vst.msk [vmem:[%s280 + $0xa8] sm:$0xff] %vm1546, %v1503
      %1569 = vst.msk [vmem:[%s280 + $0xb0] sm:$0xff] %vm1546, %v1508
      %1570 = vst.msk [vmem:[%s280 + $0xb8] sm:$0xff] %vm1546, %v1511
      %1571 = vst.msk [vmem:[%s280 + $0xc0] sm:$0xff] %vm1546, %v1516
      %1572 = vst.msk [vmem:[%s280 + $0xc8] sm:$0xff] %vm1546, %v1519
      %1573 = vst.msk [vmem:[%s280 + $0xd0] sm:$0xff] %vm1546, %v1524
      %1574 = vst.msk [vmem:[%s280 + $0xd8] sm:$0xff] %vm1546, %v1527
      %1575 = vst.msk [vmem:[%s280 + $0xe0] sm:$0xff] %vm1546, %v1532
      %1576 = vst.msk [vmem:[%s280 + $0xe8] sm:$0xff] %vm1546, %v1535
      %1577 = vst.msk [vmem:[%s280 + $0xf0] sm:$0xff] %vm1546, %v1540
      %1578 = vst.msk [vmem:[%s280 + $0xf8] sm:$0xff] %vm1546, %v1543
      %s1579 = smul.u32 32, %s18
      %p1580 = scmp.lt.s32.totalorder %s1579, 63
      %s1581 = scalar_select %p1580, %s1579, 63
      %s1582 = smul.addr %s1581, 8
      %s1583 = scalar_lea.vmem %s7, %s1582
      // Predicated region
      $region49: #{mlp_forward.1} parent=47 // pred_check
        %p1584 = pneg %p188
      $region50: #{mlp_forward.1} parent=47 // pred_check_branch
        %1586 = sbr.rel (%p1584) target = $region52
      $region51: #{mlp_forward.1} parent=47 // pred_region
        %s1587 = smul.u32 32, %s18
      $region52: #{mlp_forward.1} parent=47 // pred_fallthru
        _
    $region48: #{mlp_forward.1} parent=5 // pred_fallthru
      _
    %p1588 = scmp.le.s32.totalorder 2, %s13
    // Predicated region
    $region53: #{mlp_forward.1} parent=5 // pred_check
      %p1589 = pneg %p1588
    $region54: #{mlp_forward.1} parent=5 // pred_check_branch
      %1591 = sbr.rel (%p1589) target = $region56
    $region55: #{mlp_forward.1} parent=5 // pred_region
      %s1592 = ssub.s32 %s13, 2
      // Predicated region
      $region57: #{mlp_forward.1} parent=55 // pred_check
        %p1593 = pneg %p194
      $region58: #{mlp_forward.1} parent=55 // pred_check_branch
        %1595 = sbr.rel (%p1593) target = $region60
      $region59: #{mlp_forward.1} parent=55 // pred_region
        %s1596 = smul.u32 32, %s19
        %p1597 = scmp.lt.s32.totalorder %s1596, 63
        %s1598 = scalar_select %p1597, %s1596, 63
        %s1599 = smul.addr %s1598, 8
        %s1600 = scalar_lea.vmem %s7, %s1599
      $region60: #{mlp_forward.1} parent=55 // pred_fallthru
        _
    $region56: #{mlp_forward.1} parent=5 // pred_fallthru
      _
  $region6: #{mlp_forward.1} parent=0 // loop_footer
    %s17 = sadd.s32 1, %s13
  $region7: #{mlp_forward.1} parent=0 // loop_footer_branch
    %12 = sbr.rel target = $region3
  $region8: #{mlp_forward.1} parent=0 // loop_exit
    _

</llo_original>
